<compile_context>
chip_gen: v7x
topology: tpu7x:2x2x1
jax: 0.10.0
libtpu: 0.0.40
codegen_flags: <defaults>
</compile_context>

<pallas_src>
import functools

import jax
import jax.numpy as jnp
from jax.experimental import pallas as pl
from jax.experimental.pallas import tpu as pltpu

LANE = 128


def _round_up(x, m):
    return (x + m - 1) // m * m


def _pick_row_chunk(h_out, w_out, target_rows):
    """Largest divisor d of h_out with d*w_out <= target_rows and a sublane-
    aligned (multiple of 8) row count; falls back to a single full-image chunk
    so the output block stays aligned."""
    best = None
    for d in range(1, h_out + 1):
        if h_out % d == 0 and d * w_out <= target_rows and (d * w_out) % 8 == 0:
            best = d
    return best if best is not None else h_out


# ----------------------------- Pallas kernel --------------------------------

def _conv3x3_bn_kernel(*refs, stride, h_out, w_out, row_chunk, relu,
                       has_residual):
    """3x3 conv (9 shifted MXU matmuls) + folded-BN bias + fused residual/ReLU.

    refs layout (inputs, output, scratch):
      has_residual=False: x, w, b,            o, acc[, pad]
      has_residual=True:  x, w, b, r, wd, bd, o, acc[, pad]
    x: stride==1 -> (1, h_out, w_out, C_k)     unpadded image block
       stride==2 -> (4, h_out+1, w_out+1, C_k) phase-split padded image block
    w: (9, C_k, Cp) bf16 weights with the BN scale pre-folded.
    r: (1, Rh, Rw, C_r) residual source, consumed through a 1x1 matmul with
       wd (padded identity matrix for the plain residual add).
    pad: VMEM scratch (h_out+2, w_out+2, C_k), stride==1 only; holds the
       zero-haloed image so the halo never round-trips through HBM.
    """
    if has_residual:
        x_ref, w_ref, b_ref, r_ref, wd_ref, bd_ref = refs[:6]
        rest = refs[6:]
    else:
        x_ref, w_ref, b_ref = refs[:3]
        rest = refs[3:]
    if stride == 1:
        o_ref, acc_ref, pad_ref = rest
    else:
        o_ref, acc_ref = rest
        pad_ref = None

    j = pl.program_id(1)                        # row-chunk index
    r0 = j * row_chunk
    rows = row_chunk * w_out

    if stride == 1:
        # Build the zero-padded image in VMEM once per image (chunk 0); later
        # chunks of the same image reuse it (chunk axis is sequential).
        @pl.when(j == 0)
        def _():
            pad_ref[...] = jnp.zeros_like(pad_ref)
            pad_ref[1:h_out + 1, 1:w_out + 1, :] = x_ref[0]

    # 9 taps: contiguous static-width slices of the VMEM-resident tile,
    # accumulated into an f32 VMEM scratch (no live vreg accumulator).
    t = 0
    for ky in range(3):
        for kx in range(3):
            if stride == 1:
                tap = pad_ref[pl.ds(r0 + ky, row_chunk), kx:kx + w_out, :]
            else:
                ph = (ky % 2) * 2 + (kx % 2)
                oy, ox = ky // 2, kx // 2
                tap = x_ref[ph, pl.ds(r0 + oy, row_chunk), ox:ox + w_out, :]
            d = jnp.dot(tap.reshape(rows, tap.shape[-1]), w_ref[t],
                        preferred_element_type=jnp.float32)
            if t == 0:
                acc_ref[...] = d
            else:
                acc_ref[...] += d
            t += 1

    y = acc_ref[...] + b_ref[...]               # BN bias (scale folded in w)
    if has_residual:                            # identity OR 1x1-conv + BN
        res = r_ref[0, pl.ds(r0, row_chunk), 0:w_out, :]
        y = y + jnp.dot(res.reshape(rows, res.shape[-1]), wd_ref[...],
                        preferred_element_type=jnp.float32) + bd_ref[...]
    if relu:
        y = jnp.maximum(y, 0.0)
    o_ref[0] = y.astype(o_ref.dtype)


def _conv_block(x_in, w_mat, bias, *, stride, h_out, w_out, relu, res=None,
                out_dtype=jnp.bfloat16, target_rows=256):
    """One fused conv3x3 + BN (+residual) (+ReLU) pass over a batch.

    x_in: stride==1 -> (n, h_out, w_out, C_k) unpadded activation.
          stride==2 -> (n*4, h_out+1, w_out+1, C_k) phase-split padded input.
    res : None, or (r_arr, r_phases, wd, bd); r_arr is either the unpadded
          input (r_phases=1) or the stride-2 phase split (r_phases=4, phase 3
          == x[:, ::2, ::2, :]).
    Returns (n, h_out*w_out, Cp) in out_dtype.
    """
    n_ph = 1 if stride == 1 else 4
    n = x_in.shape[0] // n_ph
    c_k = x_in.shape[-1]
    cp = w_mat.shape[-1]
    m = h_out * w_out
    row_chunk = _pick_row_chunk(h_out, w_out, target_rows)
    n_chunks = h_out // row_chunk
    rows = row_chunk * w_out

    kernel = functools.partial(
        _conv3x3_bn_kernel, stride=stride, h_out=h_out, w_out=w_out,
        row_chunk=row_chunk, relu=relu, has_residual=res is not None)

    # Whole (phase-split) image stays VMEM-resident across the chunk axis.
    in_specs = [
        pl.BlockSpec((n_ph,) + x_in.shape[1:], lambda i, j: (i, 0, 0, 0)),
        pl.BlockSpec(w_mat.shape, lambda i, j: (0, 0, 0)),
        pl.BlockSpec(bias.shape, lambda i, j: (0, 0)),
    ]
    args = [x_in, w_mat, bias]
    if res is not None:
        r_arr, r_phases, wd, bd = res

        def _res_map(ps):
            return lambda i, j: (i * ps + ps - 1, 0, 0, 0)

        in_specs += [
            pl.BlockSpec((1,) + r_arr.shape[1:], _res_map(r_phases)),
            pl.BlockSpec(wd.shape, lambda i, j: (0, 0)),
            pl.BlockSpec(bd.shape, lambda i, j: (0, 0)),
        ]
        args += [r_arr, wd, bd]

    scratch_shapes = [pltpu.VMEM((rows, cp), jnp.float32)]
    if stride == 1:
        scratch_shapes.append(
            pltpu.VMEM((h_out + 2, w_out + 2, c_k), x_in.dtype))

    return pl.pallas_call(
        kernel,
        out_shape=jax.ShapeDtypeStruct((n, m, cp), out_dtype),
        grid=(n, n_chunks),
        in_specs=in_specs,
        out_specs=pl.BlockSpec((1, rows, cp), lambda i, j: (i, j, 0)),
        scratch_shapes=scratch_shapes,
        compiler_params=pltpu.CompilerParams(
            # batch: megacore-shard; chunks: sequential (the VMEM pad scratch
            # filled at chunk 0 is reused by later chunks of the same image).
            dimension_semantics=("parallel", "arbitrary"),
            vmem_limit_bytes=32 * 1024 * 1024),
    )(*args)


# ------------------------------- JAX glue -----------------------------------

def _phase_split2(x_nhwc):
    """Pad (conv padding=1) and split a stride-2 conv input into 4 phase
    sub-images so every in-kernel tap is a contiguous slice.  Phase 3 equals
    x[:, ::2, ::2, :] and doubles as the 1x1-downsample residual source."""
    n, h, w, c = x_nhwc.shape
    h1 = (h - 1) // 2 + 1
    w1 = (w - 1) // 2 + 1
    hph, wph = h1 + 1, w1 + 1
    xp = jnp.pad(x_nhwc,
                 ((0, 0), (1, 2 * hph - h - 1), (1, 2 * wph - w - 1), (0, 0)))
    xp = xp.reshape(n, hph, 2, wph, 2, c).transpose(0, 2, 4, 1, 3, 5)
    return xp.reshape(n * 4, hph, wph, c), h1, w1


def _fold_bn(bn, eps=1e-5):
    gamma, beta, mean, var = bn
    scale = gamma / jnp.sqrt(var + eps)
    return scale, beta - mean * scale


def _bias_pad(bias, cp):
    return jnp.pad(bias, (0, cp - bias.shape[0]))[None, :].astype(jnp.float32)


def _w3x3_to_mat(w, scale, c_in_pad, c_out_pad):
    # (C_out, C_in, 3, 3) -> (9, c_in_pad, c_out_pad) bf16, BN scale folded.
    c_out, c_in = w.shape[0], w.shape[1]
    wm = jnp.transpose(w, (2, 3, 1, 0)).reshape(9, c_in, c_out)
    wm = wm * scale[None, None, :]
    wm = jnp.pad(wm, ((0, 0), (0, c_in_pad - c_in), (0, c_out_pad - c_out)))
    return wm.astype(jnp.bfloat16)


def _w1x1_to_mat(w, scale, c_out_pad):
    # (C_out, C_in, 1, 1) -> (C_in, c_out_pad) bf16, BN scale folded.
    c_out = w.shape[0]
    wm = jnp.transpose(w[:, :, 0, 0], (1, 0)) * scale[None, :]
    wm = jnp.pad(wm, ((0, 0), (0, c_out_pad - c_out)))
    return wm.astype(jnp.bfloat16)


def basic_block_nhwc(params, x_nhwc, c_in, c_out, is_downsample, *,
                     target_rows=256):
    """BasicBlock forward in NHWC.  Returns (n, h1, w1, Cp) bf16 with
    Cp = round_up(c_out, 128); channels >= c_out are zero."""
    has_ds = is_downsample or (c_in != c_out)
    stride = 2 if is_downsample else 1
    cp = _round_up(c_out, LANE)
    n, h, w, _ = x_nhwc.shape
    x = x_nhwc.astype(jnp.bfloat16)

    s1, b1 = _fold_bn(params["bn1"])
    s2, b2 = _fold_bn(params["bn2"])
    w1m = _w3x3_to_mat(params["w1"], s1, c_in, cp)
    w2m = _w3x3_to_mat(params["w2"], s2, cp, cp)
    b1p = _bias_pad(b1, cp)
    b2p = _bias_pad(b2, cp)

    if stride == 2:
        x1, h1, w1 = _phase_split2(x)          # conv1 input + residual source
        r_arr, r_phases = x1, 4                # phase 3 == x[:, ::2, ::2, :]
    else:
        x1, h1, w1 = x, h, w                   # no HBM pad: halo built in VMEM
        r_arr, r_phases = x, 1

    # conv1 (3x3, stride s, pad 1) + bn1 + relu -> (n, h1*w1, cp) bf16
    y = _conv_block(x1, w1m, b1p, stride=stride, h_out=h1, w_out=w1,
                    relu=True, target_rows=target_rows)

    # Residual operands (fused into conv2; identity == 1x1 eye matmul so no
    # channel-pad copy of x is ever materialized).
    if has_ds:
        sd, bd = _fold_bn(params["bnd"])
        wdm = _w1x1_to_mat(params["wd"], sd, cp)
        bdp = _bias_pad(bd, cp)
    else:
        wdm = jnp.pad(jnp.eye(c_in, dtype=jnp.float32),
                      ((0, 0), (0, cp - c_in))).astype(jnp.bfloat16)
        bdp = jnp.zeros((1, cp), jnp.float32)

    # conv2 (3x3, stride 1, pad 1) + bn2 + residual (+1x1 ds conv+bn) + relu
    out = _conv_block(y.reshape(n, h1, w1, cp), w2m, b2p, stride=1,
                      h_out=h1, w_out=w1, relu=True,
                      res=(r_arr, r_phases, wdm, bdp),
                      target_rows=target_rows)
    return out.reshape(n, h1, w1, cp)


def basic_block_forward(params, x_nchw, c_in, c_out, is_downsample, *,
                        target_rows=256):
    # TODO(synk): in a full ResNet keep the cp-padded NHWC bf16 layout
    # end-to-end; the NCHW<->NHWC transposes, channel un-pad and f32 cast here
    # exist only for interface parity with the PyTorch module.
    x = jnp.transpose(x_nchw, (0, 2, 3, 1))
    out = basic_block_nhwc(params, x, c_in, c_out, is_downsample,
                           target_rows=target_rows)
    out = out[..., :c_out].astype(jnp.float32)
    return jnp.transpose(out, (0, 3, 1, 2))


# ------------------------- reference + param init ---------------------------

def ref_forward(params, x_nchw, c_in, c_out, is_downsample):
    def conv(x, w, stride, pad):
        return jax.lax.conv_general_dilated(
            x, w, (stride, stride), [(pad, pad), (pad, pad)],
            dimension_numbers=("NCHW", "OIHW", "NCHW"))

    def bn(x, gamma, beta, mean, var, eps=1e-5):
        s = gamma / jnp.sqrt(var + eps)
        b = beta - mean * s
        return x * s[None, :, None, None] + b[None, :, None, None]

    has_ds = is_downsample or (c_in != c_out)
    stride = 2 if is_downsample else 1
    y = jnp.maximum(bn(conv(x_nchw, params["w1"], stride, 1), *params["bn1"]), 0.0)
    y = bn(conv(y, params["w2"], 1, 1), *params["bn2"])
    if has_ds:
        xr = bn(conv(x_nchw, params["wd"], stride, 0), *params["bnd"])
    else:
        xr = x_nchw
    return jnp.maximum(xr + y, 0.0)


def _init_bn(key, c):
    k1, k2, k3, k4 = jax.random.split(key, 4)
    gamma = 1.0 + 0.1 * jax.random.normal(k1, (c,), jnp.float32)
    beta = 0.1 * jax.random.normal(k2, (c,), jnp.float32)
    mean = 0.1 * jax.random.normal(k3, (c,), jnp.float32)
    var = 0.5 + jnp.abs(jax.random.normal(k4, (c,), jnp.float32)) * 0.1
    return (gamma, beta, mean, var)


def init_basic_block_params(key, c_in, c_out, is_downsample):
    has_ds = is_downsample or (c_in != c_out)
    keys = jax.random.split(key, 6)
    params = {
        "w1": 0.1 * jax.random.normal(keys[0], (c_out, c_in, 3, 3), jnp.float32),
        "bn1": _init_bn(keys[1], c_out),
        "w2": 0.1 * jax.random.normal(keys[2], (c_out, c_out, 3, 3), jnp.float32),
        "bn2": _init_bn(keys[3], c_out),
    }
    if has_ds:
        params["wd"] = 0.1 * jax.random.normal(
            keys[4], (c_out, c_in, 1, 1), jnp.float32)
        params["bnd"] = _init_bn(keys[5], c_out)
    return params


# --------------------------------- main --------------------------------------

if __name__ == "__main__":
    key = jax.random.PRNGKey(0)
    kx, kp1, kp2, kx3, kp3 = jax.random.split(key, 5)

    # bf16 MXU operands + bf16 activations, f32 accumulation -> relaxed tol.
    TOL = 4e-2

    # Config 1: c_in != c_out (implicit 1x1 stride-1 downsample branch).
    # target_rows=64 forces the multi-chunk grid path (4 row chunks/image).
    c_in, c_out = 4, 8
    x = jax.random.normal(kx, (2, c_in, 16, 16), jnp.float32)
    p1 = init_basic_block_params(kp1, c_in, c_out, is_downsample=False)
    out1 = jax.block_until_ready(
        basic_block_forward(p1, x, c_in, c_out, False, target_rows=64))
    ref1 = ref_forward(p1, x, c_in, c_out, False)
    assert out1.shape == (2, c_out, 16, 16)
    assert jnp.allclose(out1, ref1, atol=TOL, rtol=TOL)

    # Config 2: is_downsample=True (stride-2 phase-split conv1 + 1x1 s2 ds).
    p2 = init_basic_block_params(kp2, c_in, c_out, is_downsample=True)
    out2 = jax.block_until_ready(basic_block_forward(p2, x, c_in, c_out, True))
    ref2 = ref_forward(p2, x, c_in, c_out, True)
    assert out2.shape == (2, c_out, 8, 8)
    assert jnp.allclose(out2, ref2, atol=TOL, rtol=TOL)

    # Config 3: c_in == c_out (identity residual via in-kernel eye matmul).
    c3 = 8
    x3 = jax.random.normal(kx3, (2, c3, 16, 16), jnp.float32)
    p3 = init_basic_block_params(kp3, c3, c3, is_downsample=False)
    out3 = jax.block_until_ready(basic_block_forward(p3, x3, c3, c3, False))
    ref3 = ref_forward(p3, x3, c3, c3, False)
    assert out3.shape == (2, c3, 16, 16)
    assert jnp.allclose(out3, ref3, atol=TOL, rtol=TOL)

    print("KERNEL_OK")
</pallas_src>

<mosaic_0001>
module attributes {stable_mosaic.version = 11 : i64} {
  func.func @_conv3x3_bn_kernel(%arg0: i32, %arg1: i32, %arg2: memref<1x16x16x4xbf16, #tpu.memory_space<vmem>>, %arg3: memref<9x4x128xbf16, #tpu.memory_space<vmem>>, %arg4: memref<1x128xf32, #tpu.memory_space<vmem>>, %arg5: memref<1x64x128xbf16, #tpu.memory_space<vmem>>, %arg6: memref<64x128xf32, #tpu.memory_space<vmem>>, %arg7: memref<18x18x4xbf16, #tpu.memory_space<vmem>>) attributes {dimension_semantics = [#tpu.dimension_semantics<parallel>, #tpu.dimension_semantics<arbitrary>], iteration_bounds = array<i64: 2, 4>, scalar_prefetch = 0 : i64, scratch_operands = 2 : i64, tpu.core_type = #tpu.core_type<tc>, window_params = [{transform_indices = @transform_0, window_bounds = array<i64: 1, 16, 16, 4>}, {pipeline_mode = #tpu.pipeline_mode<synchronous>, transform_indices = @transform_1, window_bounds = array<i64: 9, 4, 128>}, {pipeline_mode = #tpu.pipeline_mode<synchronous>, transform_indices = @transform_2, window_bounds = array<i64: 1, 128>}, {transform_indices = @transform_3, window_bounds = array<i64: 1, 64, 128>}]} {
    %c4_i32 = arith.constant 4 : i32
    %0 = arith.muli %arg1, %c4_i32 : i32
    %c0_i32 = arith.constant 0 : i32
    %1 = arith.cmpi eq, %arg1, %c0_i32 : i32
    %2 = arith.extui %1 : i1 to i32
    %c0_i32_0 = arith.constant 0 : i32
    %3 = arith.cmpi ne, %2, %c0_i32_0 : i32
    scf.if %3 {
      %cst_94 = arith.constant 0.000000e+00 : bf16
      %102 = vector.broadcast %cst_94 : bf16 to vector<18x18x4xbf16>
      %c0_95 = arith.constant 0 : index
      %c0_96 = arith.constant 0 : index
      %c0_97 = arith.constant 0 : index
      %103 = vector.load %arg7[%c0_95, %c0_96, %c0_97] : memref<18x18x4xbf16, #tpu.memory_space<vmem>>, vector<18x18x4xbf16>
      tpu.vector_store %arg7[%c0_95, %c0_96, %c0_97], %102 {strides = array<i32>} : memref<18x18x4xbf16, #tpu.memory_space<vmem>>, vector<18x18x4xbf16>,
      %c0_98 = arith.constant 0 : index
      %c0_99 = arith.constant 0 : index
      %c0_100 = arith.constant 0 : index
      %c0_101 = arith.constant 0 : index
      %104 = vector.load %arg2[%c0_98, %c0_99, %c0_100, %c0_101] : memref<1x16x16x4xbf16, #tpu.memory_space<vmem>>, vector<1x16x16x4xbf16>
      %105 = vector.shape_cast %104 : vector<1x16x16x4xbf16> to vector<16x16x4xbf16>
      %c1_102 = arith.constant 1 : index
      %c1_103 = arith.constant 1 : index
      %c0_104 = arith.constant 0 : index
      %106 = vector.load %arg7[%c1_102, %c1_103, %c0_104] : memref<18x18x4xbf16, #tpu.memory_space<vmem>>, vector<16x16x4xbf16>
      tpu.vector_store %arg7[%c1_102, %c1_103, %c0_104], %105 {strides = array<i32>} : memref<18x18x4xbf16, #tpu.memory_space<vmem>>, vector<16x16x4xbf16>,
    } else {
    }
    %c0_i32_1 = arith.constant 0 : i32
    %4 = arith.addi %0, %c0_i32_1 : i32
    %5 = arith.index_cast %4 : i32 to index
    %c0 = arith.constant 0 : index
    %c0_2 = arith.constant 0 : index
    %6 = vector.load %arg7[%5, %c0, %c0_2] : memref<18x18x4xbf16, #tpu.memory_space<vmem>>, vector<4x16x4xbf16>
    %7 = vector.shape_cast %6 : vector<4x16x4xbf16> to vector<64x4xbf16>
    %c0_3 = arith.constant 0 : index
    %c0_4 = arith.constant 0 : index
    %c0_5 = arith.constant 0 : index
    %8 = vector.load %arg3[%c0_3, %c0_4, %c0_5] : memref<9x4x128xbf16, #tpu.memory_space<vmem>>, vector<1x4x128xbf16>
    %9 = vector.shape_cast %8 : vector<1x4x128xbf16> to vector<4x128xbf16>
    %cst = arith.constant dense<0.000000e+00> : vector<64x128xf32>
    %10 = tpu.matmul %7, %9, %cst {dimension_numbers = #tpu.dot_dimension_numbers<[1], [0], [0], [1], [0, 0, 1, 1], [], []>} : vector<64x4xbf16>, vector<4x128xbf16>, vector<64x128xf32> -> vector<64x128xf32>
    %c0_6 = arith.constant 0 : index
    %c0_7 = arith.constant 0 : index
    %11 = vector.load %arg6[%c0_6, %c0_7] : memref<64x128xf32, #tpu.memory_space<vmem>>, vector<64x128xf32>
    tpu.vector_store %arg6[%c0_6, %c0_7], %10 {strides = array<i32>} : memref<64x128xf32, #tpu.memory_space<vmem>>, vector<64x128xf32>,
    %c0_i32_8 = arith.constant 0 : i32
    %12 = arith.addi %0, %c0_i32_8 : i32
    %13 = arith.index_cast %12 : i32 to index
    %c1 = arith.constant 1 : index
    %c0_9 = arith.constant 0 : index
    %14 = vector.load %arg7[%13, %c1, %c0_9] : memref<18x18x4xbf16, #tpu.memory_space<vmem>>, vector<4x16x4xbf16>
    %15 = vector.shape_cast %14 : vector<4x16x4xbf16> to vector<64x4xbf16>
    %c1_10 = arith.constant 1 : index
    %c0_11 = arith.constant 0 : index
    %c0_12 = arith.constant 0 : index
    %16 = vector.load %arg3[%c1_10, %c0_11, %c0_12] : memref<9x4x128xbf16, #tpu.memory_space<vmem>>, vector<1x4x128xbf16>
    %17 = vector.shape_cast %16 : vector<1x4x128xbf16> to vector<4x128xbf16>
    %cst_13 = arith.constant dense<0.000000e+00> : vector<64x128xf32>
    %18 = tpu.matmul %15, %17, %cst_13 {dimension_numbers = #tpu.dot_dimension_numbers<[1], [0], [0], [1], [0, 0, 1, 1], [], []>} : vector<64x4xbf16>, vector<4x128xbf16>, vector<64x128xf32> -> vector<64x128xf32>
    %c0_14 = arith.constant 0 : index
    %c0_15 = arith.constant 0 : index
    %19 = vector.load %arg6[%c0_14, %c0_15] : memref<64x128xf32, #tpu.memory_space<vmem>>, vector<64x128xf32>
    %20 = arith.addf %19, %18 : vector<64x128xf32>
    %c0_16 = arith.constant 0 : index
    %c0_17 = arith.constant 0 : index
    %21 = vector.load %arg6[%c0_16, %c0_17] : memref<64x128xf32, #tpu.memory_space<vmem>>, vector<64x128xf32>
    tpu.vector_store %arg6[%c0_16, %c0_17], %20 {strides = array<i32>} : memref<64x128xf32, #tpu.memory_space<vmem>>, vector<64x128xf32>,
    %c0_i32_18 = arith.constant 0 : i32
    %22 = arith.addi %0, %c0_i32_18 : i32
    %23 = arith.index_cast %22 : i32 to index
    %c2 = arith.constant 2 : index
    %c0_19 = arith.constant 0 : index
    %24 = vector.load %arg7[%23, %c2, %c0_19] : memref<18x18x4xbf16, #tpu.memory_space<vmem>>, vector<4x16x4xbf16>
    %25 = vector.shape_cast %24 : vector<4x16x4xbf16> to vector<64x4xbf16>
    %c2_20 = arith.constant 2 : index
    %c0_21 = arith.constant 0 : index
    %c0_22 = arith.constant 0 : index
    %26 = vector.load %arg3[%c2_20, %c0_21, %c0_22] : memref<9x4x128xbf16, #tpu.memory_space<vmem>>, vector<1x4x128xbf16>
    %27 = vector.shape_cast %26 : vector<1x4x128xbf16> to vector<4x128xbf16>
    %cst_23 = arith.constant dense<0.000000e+00> : vector<64x128xf32>
    %28 = tpu.matmul %25, %27, %cst_23 {dimension_numbers = #tpu.dot_dimension_numbers<[1], [0], [0], [1], [0, 0, 1, 1], [], []>} : vector<64x4xbf16>, vector<4x128xbf16>, vector<64x128xf32> -> vector<64x128xf32>
    %c0_24 = arith.constant 0 : index
    %c0_25 = arith.constant 0 : index
    %29 = vector.load %arg6[%c0_24, %c0_25] : memref<64x128xf32, #tpu.memory_space<vmem>>, vector<64x128xf32>
    %30 = arith.addf %29, %28 : vector<64x128xf32>
    %c0_26 = arith.constant 0 : index
    %c0_27 = arith.constant 0 : index
    %31 = vector.load %arg6[%c0_26, %c0_27] : memref<64x128xf32, #tpu.memory_space<vmem>>, vector<64x128xf32>
    tpu.vector_store %arg6[%c0_26, %c0_27], %30 {strides = array<i32>} : memref<64x128xf32, #tpu.memory_space<vmem>>, vector<64x128xf32>,
    %c1_i32 = arith.constant 1 : i32
    %32 = arith.addi %0, %c1_i32 : i32
    %33 = arith.index_cast %32 : i32 to index
    %c0_28 = arith.constant 0 : index
    %c0_29 = arith.constant 0 : index
    %34 = vector.load %arg7[%33, %c0_28, %c0_29] : memref<18x18x4xbf16, #tpu.memory_space<vmem>>, vector<4x16x4xbf16>
    %35 = vector.shape_cast %34 : vector<4x16x4xbf16> to vector<64x4xbf16>
    %c3 = arith.constant 3 : index
    %c0_30 = arith.constant 0 : index
    %c0_31 = arith.constant 0 : index
    %36 = vector.load %arg3[%c3, %c0_30, %c0_31] : memref<9x4x128xbf16, #tpu.memory_space<vmem>>, vector<1x4x128xbf16>
    %37 = vector.shape_cast %36 : vector<1x4x128xbf16> to vector<4x128xbf16>
    %cst_32 = arith.constant dense<0.000000e+00> : vector<64x128xf32>
    %38 = tpu.matmul %35, %37, %cst_32 {dimension_numbers = #tpu.dot_dimension_numbers<[1], [0], [0], [1], [0, 0, 1, 1], [], []>} : vector<64x4xbf16>, vector<4x128xbf16>, vector<64x128xf32> -> vector<64x128xf32>
    %c0_33 = arith.constant 0 : index
    %c0_34 = arith.constant 0 : index
    %39 = vector.load %arg6[%c0_33, %c0_34] : memref<64x128xf32, #tpu.memory_space<vmem>>, vector<64x128xf32>
    %40 = arith.addf %39, %38 : vector<64x128xf32>
    %c0_35 = arith.constant 0 : index
    %c0_36 = arith.constant 0 : index
    %41 = vector.load %arg6[%c0_35, %c0_36] : memref<64x128xf32, #tpu.memory_space<vmem>>, vector<64x128xf32>
    tpu.vector_store %arg6[%c0_35, %c0_36], %40 {strides = array<i32>} : memref<64x128xf32, #tpu.memory_space<vmem>>, vector<64x128xf32>,
    %c1_i32_37 = arith.constant 1 : i32
    %42 = arith.addi %0, %c1_i32_37 : i32
    %43 = arith.index_cast %42 : i32 to index
    %c1_38 = arith.constant 1 : index
    %c0_39 = arith.constant 0 : index
    %44 = vector.load %arg7[%43, %c1_38, %c0_39] : memref<18x18x4xbf16, #tpu.memory_space<vmem>>, vector<4x16x4xbf16>
    %45 = vector.shape_cast %44 : vector<4x16x4xbf16> to vector<64x4xbf16>
    %c4 = arith.constant 4 : index
    %c0_40 = arith.constant 0 : index
    %c0_41 = arith.constant 0 : index
    %46 = vector.load %arg3[%c4, %c0_40, %c0_41] : memref<9x4x128xbf16, #tpu.memory_space<vmem>>, vector<1x4x128xbf16>
    %47 = vector.shape_cast %46 : vector<1x4x128xbf16> to vector<4x128xbf16>
    %cst_42 = arith.constant dense<0.000000e+00> : vector<64x128xf32>
    %48 = tpu.matmul %45, %47, %cst_42 {dimension_numbers = #tpu.dot_dimension_numbers<[1], [0], [0], [1], [0, 0, 1, 1], [], []>} : vector<64x4xbf16>, vector<4x128xbf16>, vector<64x128xf32> -> vector<64x128xf32>
    %c0_43 = arith.constant 0 : index
    %c0_44 = arith.constant 0 : index
    %49 = vector.load %arg6[%c0_43, %c0_44] : memref<64x128xf32, #tpu.memory_space<vmem>>, vector<64x128xf32>
    %50 = arith.addf %49, %48 : vector<64x128xf32>
    %c0_45 = arith.constant 0 : index
    %c0_46 = arith.constant 0 : index
    %51 = vector.load %arg6[%c0_45, %c0_46] : memref<64x128xf32, #tpu.memory_space<vmem>>, vector<64x128xf32>
    tpu.vector_store %arg6[%c0_45, %c0_46], %50 {strides = array<i32>} : memref<64x128xf32, #tpu.memory_space<vmem>>, vector<64x128xf32>,
    %c1_i32_47 = arith.constant 1 : i32
    %52 = arith.addi %0, %c1_i32_47 : i32
    %53 = arith.index_cast %52 : i32 to index
    %c2_48 = arith.constant 2 : index
    %c0_49 = arith.constant 0 : index
    %54 = vector.load %arg7[%53, %c2_48, %c0_49] : memref<18x18x4xbf16, #tpu.memory_space<vmem>>, vector<4x16x4xbf16>
    %55 = vector.shape_cast %54 : vector<4x16x4xbf16> to vector<64x4xbf16>
    %c5 = arith.constant 5 : index
    %c0_50 = arith.constant 0 : index
    %c0_51 = arith.constant 0 : index
    %56 = vector.load %arg3[%c5, %c0_50, %c0_51] : memref<9x4x128xbf16, #tpu.memory_space<vmem>>, vector<1x4x128xbf16>
    %57 = vector.shape_cast %56 : vector<1x4x128xbf16> to vector<4x128xbf16>
    %cst_52 = arith.constant dense<0.000000e+00> : vector<64x128xf32>
    %58 = tpu.matmul %55, %57, %cst_52 {dimension_numbers = #tpu.dot_dimension_numbers<[1], [0], [0], [1], [0, 0, 1, 1], [], []>} : vector<64x4xbf16>, vector<4x128xbf16>, vector<64x128xf32> -> vector<64x128xf32>
    %c0_53 = arith.constant 0 : index
    %c0_54 = arith.constant 0 : index
    %59 = vector.load %arg6[%c0_53, %c0_54] : memref<64x128xf32, #tpu.memory_space<vmem>>, vector<64x128xf32>
    %60 = arith.addf %59, %58 : vector<64x128xf32>
    %c0_55 = arith.constant 0 : index
    %c0_56 = arith.constant 0 : index
    %61 = vector.load %arg6[%c0_55, %c0_56] : memref<64x128xf32, #tpu.memory_space<vmem>>, vector<64x128xf32>
    tpu.vector_store %arg6[%c0_55, %c0_56], %60 {strides = array<i32>} : memref<64x128xf32, #tpu.memory_space<vmem>>, vector<64x128xf32>,
    %c2_i32 = arith.constant 2 : i32
    %62 = arith.addi %0, %c2_i32 : i32
    %63 = arith.index_cast %62 : i32 to index
    %c0_57 = arith.constant 0 : index
    %c0_58 = arith.constant 0 : index
    %64 = vector.load %arg7[%63, %c0_57, %c0_58] : memref<18x18x4xbf16, #tpu.memory_space<vmem>>, vector<4x16x4xbf16>
    %65 = vector.shape_cast %64 : vector<4x16x4xbf16> to vector<64x4xbf16>
    %c6 = arith.constant 6 : index
    %c0_59 = arith.constant 0 : index
    %c0_60 = arith.constant 0 : index
    %66 = vector.load %arg3[%c6, %c0_59, %c0_60] : memref<9x4x128xbf16, #tpu.memory_space<vmem>>, vector<1x4x128xbf16>
    %67 = vector.shape_cast %66 : vector<1x4x128xbf16> to vector<4x128xbf16>
    %cst_61 = arith.constant dense<0.000000e+00> : vector<64x128xf32>
    %68 = tpu.matmul %65, %67, %cst_61 {dimension_numbers = #tpu.dot_dimension_numbers<[1], [0], [0], [1], [0, 0, 1, 1], [], []>} : vector<64x4xbf16>, vector<4x128xbf16>, vector<64x128xf32> -> vector<64x128xf32>
    %c0_62 = arith.constant 0 : index
    %c0_63 = arith.constant 0 : index
    %69 = vector.load %arg6[%c0_62, %c0_63] : memref<64x128xf32, #tpu.memory_space<vmem>>, vector<64x128xf32>
    %70 = arith.addf %69, %68 : vector<64x128xf32>
    %c0_64 = arith.constant 0 : index
    %c0_65 = arith.constant 0 : index
    %71 = vector.load %arg6[%c0_64, %c0_65] : memref<64x128xf32, #tpu.memory_space<vmem>>, vector<64x128xf32>
    tpu.vector_store %arg6[%c0_64, %c0_65], %70 {strides = array<i32>} : memref<64x128xf32, #tpu.memory_space<vmem>>, vector<64x128xf32>,
    %c2_i32_66 = arith.constant 2 : i32
    %72 = arith.addi %0, %c2_i32_66 : i32
    %73 = arith.index_cast %72 : i32 to index
    %c1_67 = arith.constant 1 : index
    %c0_68 = arith.constant 0 : index
    %74 = vector.load %arg7[%73, %c1_67, %c0_68] : memref<18x18x4xbf16, #tpu.memory_space<vmem>>, vector<4x16x4xbf16>
    %75 = vector.shape_cast %74 : vector<4x16x4xbf16> to vector<64x4xbf16>
    %c7 = arith.constant 7 : index
    %c0_69 = arith.constant 0 : index
    %c0_70 = arith.constant 0 : index
    %76 = vector.load %arg3[%c7, %c0_69, %c0_70] : memref<9x4x128xbf16, #tpu.memory_space<vmem>>, vector<1x4x128xbf16>
    %77 = vector.shape_cast %76 : vector<1x4x128xbf16> to vector<4x128xbf16>
    %cst_71 = arith.constant dense<0.000000e+00> : vector<64x128xf32>
    %78 = tpu.matmul %75, %77, %cst_71 {dimension_numbers = #tpu.dot_dimension_numbers<[1], [0], [0], [1], [0, 0, 1, 1], [], []>} : vector<64x4xbf16>, vector<4x128xbf16>, vector<64x128xf32> -> vector<64x128xf32>
    %c0_72 = arith.constant 0 : index
    %c0_73 = arith.constant 0 : index
    %79 = vector.load %arg6[%c0_72, %c0_73] : memref<64x128xf32, #tpu.memory_space<vmem>>, vector<64x128xf32>
    %80 = arith.addf %79, %78 : vector<64x128xf32>
    %c0_74 = arith.constant 0 : index
    %c0_75 = arith.constant 0 : index
    %81 = vector.load %arg6[%c0_74, %c0_75] : memref<64x128xf32, #tpu.memory_space<vmem>>, vector<64x128xf32>
    tpu.vector_store %arg6[%c0_74, %c0_75], %80 {strides = array<i32>} : memref<64x128xf32, #tpu.memory_space<vmem>>, vector<64x128xf32>,
    %c2_i32_76 = arith.constant 2 : i32
    %82 = arith.addi %0, %c2_i32_76 : i32
    %83 = arith.index_cast %82 : i32 to index
    %c2_77 = arith.constant 2 : index
    %c0_78 = arith.constant 0 : index
    %84 = vector.load %arg7[%83, %c2_77, %c0_78] : memref<18x18x4xbf16, #tpu.memory_space<vmem>>, vector<4x16x4xbf16>
    %85 = vector.shape_cast %84 : vector<4x16x4xbf16> to vector<64x4xbf16>
    %c8 = arith.constant 8 : index
    %c0_79 = arith.constant 0 : index
    %c0_80 = arith.constant 0 : index
    %86 = vector.load %arg3[%c8, %c0_79, %c0_80] : memref<9x4x128xbf16, #tpu.memory_space<vmem>>, vector<1x4x128xbf16>
    %87 = vector.shape_cast %86 : vector<1x4x128xbf16> to vector<4x128xbf16>
    %cst_81 = arith.constant dense<0.000000e+00> : vector<64x128xf32>
    %88 = tpu.matmul %85, %87, %cst_81 {dimension_numbers = #tpu.dot_dimension_numbers<[1], [0], [0], [1], [0, 0, 1, 1], [], []>} : vector<64x4xbf16>, vector<4x128xbf16>, vector<64x128xf32> -> vector<64x128xf32>
    %c0_82 = arith.constant 0 : index
    %c0_83 = arith.constant 0 : index
    %89 = vector.load %arg6[%c0_82, %c0_83] : memref<64x128xf32, #tpu.memory_space<vmem>>, vector<64x128xf32>
    %90 = arith.addf %89, %88 : vector<64x128xf32>
    %c0_84 = arith.constant 0 : index
    %c0_85 = arith.constant 0 : index
    %91 = vector.load %arg6[%c0_84, %c0_85] : memref<64x128xf32, #tpu.memory_space<vmem>>, vector<64x128xf32>
    tpu.vector_store %arg6[%c0_84, %c0_85], %90 {strides = array<i32>} : memref<64x128xf32, #tpu.memory_space<vmem>>, vector<64x128xf32>,
    %c0_86 = arith.constant 0 : index
    %c0_87 = arith.constant 0 : index
    %92 = vector.load %arg6[%c0_86, %c0_87] : memref<64x128xf32, #tpu.memory_space<vmem>>, vector<64x128xf32>
    %c0_88 = arith.constant 0 : index
    %c0_89 = arith.constant 0 : index
    %93 = vector.load %arg4[%c0_88, %c0_89] : memref<1x128xf32, #tpu.memory_space<vmem>>, vector<1x128xf32>
    %94 = vector.broadcast %93 : vector<1x128xf32> to vector<64x128xf32>
    %95 = arith.addf %92, %94 : vector<64x128xf32>
    %cst_90 = arith.constant 0.000000e+00 : f32
    %96 = vector.broadcast %cst_90 : f32 to vector<64x128xf32>
    %97 = arith.maximumf %95, %96 : vector<64x128xf32>
    %98 = arith.truncf %97 : vector<64x128xf32> to vector<64x128xbf16>
    %c0_91 = arith.constant 0 : index
    %c0_92 = arith.constant 0 : index
    %c0_93 = arith.constant 0 : index
    %99 = vector.load %arg5[%c0_91, %c0_92, %c0_93] : memref<1x64x128xbf16, #tpu.memory_space<vmem>>, vector<1x64x128xbf16>
    %100 = vector.shape_cast %99 : vector<1x64x128xbf16> to vector<64x128xbf16>
    %101 = vector.shape_cast %98 : vector<64x128xbf16> to vector<1x64x128xbf16>
    tpu.vector_store %arg5[%c0_91, %c0_92, %c0_93], %101 {strides = array<i32>} : memref<1x64x128xbf16, #tpu.memory_space<vmem>>, vector<1x64x128xbf16>,
    return
  }
  func.func @transform_0(%arg0: i32, %arg1: i32) -> (i32, i32, i32, i32) {
    %c0_i32 = arith.constant 0 : i32
    %c0_i32_0 = arith.constant 0 : i32
    %c0_i32_1 = arith.constant 0 : i32
    %c0_i32_2 = arith.constant 0 : i32
    return %arg0, %c0_i32, %c0_i32_0, %c0_i32_1 : i32, i32, i32, i32
  }
  func.func @transform_1(%arg0: i32, %arg1: i32) -> (i32, i32, i32) {
    %c0_i32 = arith.constant 0 : i32
    %c0_i32_0 = arith.constant 0 : i32
    %c0_i32_1 = arith.constant 0 : i32
    %c0_i32_2 = arith.constant 0 : i32
    return %c0_i32, %c0_i32_0, %c0_i32_1 : i32, i32, i32
  }
  func.func @transform_2(%arg0: i32, %arg1: i32) -> (i32, i32) {
    %c0_i32 = arith.constant 0 : i32
    %c0_i32_0 = arith.constant 0 : i32
    %c0_i32_1 = arith.constant 0 : i32
    return %c0_i32, %c0_i32_0 : i32, i32
  }
  func.func @transform_3(%arg0: i32, %arg1: i32) -> (i32, i32, i32) {
    %c0_i32 = arith.constant 0 : i32
    %c0_i32_0 = arith.constant 0 : i32
    return %arg0, %arg1, %c0_i32 : i32, i32, i32
  }
}

</mosaic_0001>

<llo_original>
// kernel: tpu_custom_call.1
$region0: #{tpu_custom_call.1}
  #allocation0 [shape = 'u32[]', space=smem, size = 0x4, offset = 0x4, fixed_abs, tag = 'smem constant byte address 0x4 - core index']
  #allocation1 [shape = 'u32[144,128]{1,0:T(1,128)}', space=vmem, size = 0x12000, scoped, tag = 'internal scratch']
  #allocation2 [shape = 'f32[64,128]{1,0:T(8,128)}', space=vmem, size = 0x8000, scoped, tag = 'scratch operand']
  #allocation3 [shape = 'bf16[18,18,4]{2,1,0:T(8,128)(2,1)}', space=vmem, size = 0x1b000, scoped, tag = 'scratch operand']
  %s0 = inlined_call_operand.vmem [shape: bf16[2,16,16,4], index: 0, kind: input, shape index: {}]
  %s1 = inlined_call_operand.vmem [shape: bf16[9,4,128], index: 1, kind: input, shape index: {}]
  %s2 = inlined_call_operand.vmem [shape: f32[1,128], index: 2, kind: input, shape index: {}]
  %s3 = inlined_call_operand.hbm [shape: bf16[2,256,128], index: 3, kind: output, shape index: {}]
  %s4 = sld [smem:[#allocation0]]
  $region49: #{tpu_custom_call.1} parent=0
    _
  %s6 = ssub.s32 1, %s4
  %s7 = scalar_select 0, %s6, %s4
  $region1: #{tpu_custom_call.1} parent=0
    #allocation4 [shape = 'u8[32768]{0}', space=vmem, size = 0x8000, scoped, tag = 'output window, operand 0']
    #allocation5 [shape = 's32[2]{0}', space=sflag, size = 0x8, scoped, tag = 'scoped memory for tpu_custom_call.1']
    %8 = vsyncpa [#allocation5], 0
    %s9 = scalar_lea.sflag [#allocation5], 1
    %10 = vsyncpa %s9, 0
    loop: start=0, step=1, limit=10
    $region2: #{tpu_custom_call.1} parent=1 // loop_pre_header
      _
    $region3: #{tpu_custom_call.1} parent=1 // loop_header
      %s12 = sphi 0, %s16
      %p13 = scmp.ge.s32.totalorder %s12, 10
      %s19 = sphi 0, %s31
      %s20 = sphi 0, %s27
      %s21 = sphi 0, %s19
      %s22 = sphi 0, %s20
      %s23 = sphi 0, %s21
      %s24 = sphi 0, %s22
      %s34 = sphi 0, %s36
      %s37 = sphi 0, %s34
      %s38 = sphi 0, %s37
      %s54 = sphi 0, %s38
      %s58 = sphi 0, %s58
      %s60 = sphi 0, %s58
      %s61 = sphi 0, %s60
      %s75 = sphi 0, %s61
      %s79 = sphi 0, %s79
      %s81 = sphi 0, %s79
      %s82 = sphi 0, %s81
      %s96 = sphi 0, %s82
      %s104 = sphi 0, %s106
      %s107 = sphi 0, %s104
      %s108 = sphi 0, %s107
      %s124 = sphi 0, %s108
    $region4: #{tpu_custom_call.1} parent=1 // loop_header_branch
      %15 = sbr.rel (%p13) target = $region8
    $region5: #{tpu_custom_call.1} parent=1 // loop_body
      %s17 = ssub.s32 %s12, 1
      %s18 = ssub.s32 %s12, 2
      %s25 = sadd.s32 1, %s20
      %p26 = scmp.ge.s32.totalorder %s25, 4
      %s27 = scalar_select %p26, 0, %s25
      %s28 = sadd.s32 1, %s19
      %s29 = scalar_select %p26, %s28, %s19
      %p30 = scmp.ge.s32.totalorder %s29, 2
      %s31 = scalar_select %p30, 0, %s29
      %s32 = ssub.s32 %s19, %s31
      %p33 = scmp.eq.s32.totalorder %s32, 0
      %s35 = sadd.s32 %s34, 1
      %s36 = scalar_select %p33, %s34, %s35
      %p39 = pneg %p33
      %p40 = scmp.eq.s32.totalorder %s12, 7
      %p41 = por %p39, %p40
      %p42 = scmp.ne.s32.totalorder %s34, %s37
      %p43 = scmp.eq.s32.totalorder %s12, 0
      %p44 = por %p42, %p43
      %p45 = scmp.ne.s32.totalorder %s34, %s37
      %p46 = scmp.eq.s32.totalorder %s17, 7
      %p47 = por %p45, %p46
      %p48 = scmp.ne.s32.totalorder %s37, %s38
      %p49 = scmp.eq.s32.totalorder %s17, 0
      %p50 = por %p48, %p49
      %p51 = scmp.ne.s32.totalorder %s37, %s38
      %p52 = scmp.eq.s32.totalorder %s18, 7
      %p53 = por %p51, %p52
      %p55 = scmp.ne.s32.totalorder %s38, %s54
      %p56 = scmp.eq.s32.totalorder %s18, 0
      %p57 = por %p55, %p56
      %s59 = sadd.s32 %s58, 1
      %p62 = scmp.eq.s32.totalorder %s12, 7
      %p63 = scmp.ne.s32.totalorder %s58, %s60
      %p64 = scmp.eq.s32.totalorder %s12, 0
      %p65 = por %p63, %p64
      %p66 = scmp.ne.s32.totalorder %s58, %s60
      %p67 = scmp.eq.s32.totalorder %s17, 7
      %p68 = por %p66, %p67
      %p69 = scmp.ne.s32.totalorder %s60, %s61
      %p70 = scmp.eq.s32.totalorder %s17, 0
      %p71 = por %p69, %p70
      %p72 = scmp.ne.s32.totalorder %s60, %s61
      %p73 = scmp.eq.s32.totalorder %s18, 7
      %p74 = por %p72, %p73
      %p76 = scmp.ne.s32.totalorder %s61, %s75
      %p77 = scmp.eq.s32.totalorder %s18, 0
      %p78 = por %p76, %p77
      %s80 = sadd.s32 %s79, 1
      %p83 = scmp.eq.s32.totalorder %s12, 7
      %p84 = scmp.ne.s32.totalorder %s79, %s81
      %p85 = scmp.eq.s32.totalorder %s12, 0
      %p86 = por %p84, %p85
      %p87 = scmp.ne.s32.totalorder %s79, %s81
      %p88 = scmp.eq.s32.totalorder %s17, 7
      %p89 = por %p87, %p88
      %p90 = scmp.ne.s32.totalorder %s81, %s82
      %p91 = scmp.eq.s32.totalorder %s17, 0
      %p92 = por %p90, %p91
      %p93 = scmp.ne.s32.totalorder %s81, %s82
      %p94 = scmp.eq.s32.totalorder %s18, 7
      %p95 = por %p93, %p94
      %p97 = scmp.ne.s32.totalorder %s82, %s96
      %p98 = scmp.eq.s32.totalorder %s18, 0
      %p99 = por %p97, %p98
      %s100 = ssub.s32 %s19, %s31
      %s101 = ssub.s32 %s20, %s27
      %s102 = sor.u32 %s100, %s101
      %p103 = scmp.eq.s32.totalorder %s102, 0
      %s105 = sadd.s32 %s104, 1
      %s106 = scalar_select %p103, %s104, %s105
      %p109 = pneg %p103
      %p110 = scmp.eq.s32.totalorder %s12, 7
      %p111 = por %p109, %p110
      %p112 = scmp.ne.s32.totalorder %s104, %s107
      %p113 = scmp.eq.s32.totalorder %s12, 0
      %p114 = por %p112, %p113
      %p115 = scmp.ne.s32.totalorder %s104, %s107
      %p116 = scmp.eq.s32.totalorder %s17, 7
      %p117 = por %p115, %p116
      %p118 = scmp.ne.s32.totalorder %s107, %s108
      %p119 = scmp.eq.s32.totalorder %s17, 0
      %p120 = por %p118, %p119
      %p121 = scmp.ne.s32.totalorder %s107, %s108
      %p122 = scmp.eq.s32.totalorder %s18, 7
      %p123 = por %p121, %p122
      %p125 = scmp.ne.s32.totalorder %s108, %s124
      %p126 = scmp.eq.s32.totalorder %s18, 0
      %p127 = por %p125, %p126
      %p128 = scmp.le.s32.totalorder 1, %s12
      %p129 = scmp.lt.s32.totalorder %s12, 9
      %p130 = pnand %p128, %p129
      %p131 = pneg %p130
      // Predicated region
      $region9: #{tpu_custom_call.1} parent=5 // pred_check
        _
      $region10: #{tpu_custom_call.1} parent=5 // pred_check_branch
        %133 = sbr.rel (%p130) target = $region12
      $region11: #{tpu_custom_call.1} parent=5 // pred_region
        %s134 = ssub.s32 %s12, 1
        // Predicated region
        $region13: #{tpu_custom_call.1} parent=11 // pred_check
          %p135 = pneg %p71
        $region14: #{tpu_custom_call.1} parent=11 // pred_check_branch
          %137 = sbr.rel (%p135) target = $region16
        $region15: #{tpu_custom_call.1} parent=11 // pred_region
          _
        $region16: #{tpu_custom_call.1} parent=11 // pred_fallthru
          _
        // Predicated region
        $region17: #{tpu_custom_call.1} parent=11 // pred_check
          %p138 = pneg %p92
        $region18: #{tpu_custom_call.1} parent=11 // pred_check_branch
          %140 = sbr.rel (%p138) target = $region20
        $region19: #{tpu_custom_call.1} parent=11 // pred_region
          _
        $region20: #{tpu_custom_call.1} parent=11 // pred_fallthru
          _
      $region12: #{tpu_custom_call.1} parent=5 // pred_fallthru
        _
      %p141 = scmp.lt.s32.totalorder %s12, 8
      // Predicated region
      $region21: #{tpu_custom_call.1} parent=5 // pred_check
        %p142 = pneg %p141
      $region22: #{tpu_custom_call.1} parent=5 // pred_check_branch
        %144 = sbr.rel (%p142) target = $region24
      $region23: #{tpu_custom_call.1} parent=5 // pred_region
        // Predicated region
        $region25: #{tpu_custom_call.1} parent=23 // pred_check
          %p145 = pneg %p44
        $region26: #{tpu_custom_call.1} parent=23 // pred_check_branch
          %147 = sbr.rel (%p145) target = $region28
        $region27: #{tpu_custom_call.1} parent=23 // pred_region
          %p148 = scmp.lt.s32.totalorder %s19, 1
          %s149 = scalar_select %p148, %s19, 1
          %s150 = smul.addr %s149, 32
          %s151 = smul.addr %s150, 4
          %s152 = scalar_lea.vmem %s0, %s151
        $region28: #{tpu_custom_call.1} parent=23 // pred_fallthru
          _
      $region24: #{tpu_custom_call.1} parent=5 // pred_fallthru
        _
      %p153 = scmp.le.s32.totalorder 1, %s12
      %p154 = scmp.lt.s32.totalorder %s12, 9
      %p155 = pnand %p153, %p154
      %p156 = pneg %p155
      // Predicated region
      $region29: #{tpu_custom_call.1} parent=5 // pred_check
        _
      $region30: #{tpu_custom_call.1} parent=5 // pred_check_branch
        %158 = sbr.rel (%p155) target = $region32
      $region31: #{tpu_custom_call.1} parent=5 // pred_region
        %s159 = ssub.s32 %s12, 1
        %p160 = scmp.lt.s32.totalorder %s21, 1
        %s161 = scalar_select %p160, %s21, 1
        %s162 = smul.addr %s161, 32
        %s163 = smul.addr %s162, 4
        %s164 = scalar_lea.vmem %s0, %s163
        %p165 = pneg %p50
        %p166 = pneg %p47
        %p167 = pneg %p71
        %p168 = pneg %p68
        %p169 = pneg %p92
        %p170 = pneg %p89
        %p171 = pneg %p120
        %p172 = pneg %p117
        %s173 = sand.u32 %s107, 1
        %s174 = scalar_lea.sflag [#allocation5], %s173
        %s175 = sand.u32 %s107, 1
        %s176 = smul.addr %s175, 32
        %s177 = scalar_lea.vmem [#allocation4], %s176
        %p178 = scmp.lt.s32.totalorder %s21, 1
        %s179 = scalar_select %p178, %s21, 1
        %s180 = smul.addr %s179, 32
        %s181 = smul.addr %s180, 4
        %s182 = scalar_lea.vmem %s0, %s181
        %s183 = smul.u32 8, %s22
        %s185 = smul.u32 %s22, 4
        %p186 = scmp.eq.s32.totalorder %s22, 0
        // Predicated region
        $region33: #{tpu_custom_call.1} parent=31 // pred_check
          %p187 = pneg %p186
        $region34: #{tpu_custom_call.1} parent=31 // pred_check_branch
          %189 = sbr.rel (%p187) target = $region36
        $region35: #{tpu_custom_call.1} parent=31 // pred_region
          %vm190 = vcmask 27648
          %191 = vst.msk [vmem:[#allocation3] sm:$0xf] %vm190, 0
          %192 = vst.msk [vmem:[#allocation3 + $0x4] sm:$0xf] %vm190, 0
          %vm193 = vcmask 24576
          %194 = vst.msk [vmem:[#allocation3 + $0x8] sm:$0x1] %vm193, 0
          %195 = vst.msk [vmem:[#allocation3 + $0xc] sm:$0xf] %vm190, 0
          %196 = vst.msk [vmem:[#allocation3 + $0x10] sm:$0xf] %vm190, 0
          %197 = vst.msk [vmem:[#allocation3 + $0x14] sm:$0x1] %vm193, 0
          %198 = vst.msk [vmem:[#allocation3 + $0x18] sm:$0xf] %vm190, 0
          %199 = vst.msk [vmem:[#allocation3 + $0x1c] sm:$0xf] %vm190, 0
          %200 = vst.msk [vmem:[#allocation3 + $0x20] sm:$0x1] %vm193, 0
          %201 = vst.msk [vmem:[#allocation3 + $0x24] sm:$0xf] %vm190, 0
          %202 = vst.msk [vmem:[#allocation3 + $0x28] sm:$0xf] %vm190, 0
          %203 = vst.msk [vmem:[#allocation3 + $0x2c] sm:$0x1] %vm193, 0
          %204 = vst.msk [vmem:[#allocation3 + $0x30] sm:$0xf] %vm190, 0
          %205 = vst.msk [vmem:[#allocation3 + $0x34] sm:$0xf] %vm190, 0
          %206 = vst.msk [vmem:[#allocation3 + $0x38] sm:$0x1] %vm193, 0
          %207 = vst.msk [vmem:[#allocation3 + $0x3c] sm:$0xf] %vm190, 0
          %208 = vst.msk [vmem:[#allocation3 + $0x40] sm:$0xf] %vm190, 0
          %209 = vst.msk [vmem:[#allocation3 + $0x44] sm:$0x1] %vm193, 0
          %210 = vst.msk [vmem:[#allocation3 + $0x48] sm:$0xf] %vm190, 0
          %211 = vst.msk [vmem:[#allocation3 + $0x4c] sm:$0xf] %vm190, 0
          %212 = vst.msk [vmem:[#allocation3 + $0x50] sm:$0x1] %vm193, 0
          %213 = vst.msk [vmem:[#allocation3 + $0x54] sm:$0xf] %vm190, 0
          %214 = vst.msk [vmem:[#allocation3 + $0x58] sm:$0xf] %vm190, 0
          %215 = vst.msk [vmem:[#allocation3 + $0x5c] sm:$0x1] %vm193, 0
          %216 = vst.msk [vmem:[#allocation3 + $0x60] sm:$0xf] %vm190, 0
          %217 = vst.msk [vmem:[#allocation3 + $0x64] sm:$0xf] %vm190, 0
          %218 = vst.msk [vmem:[#allocation3 + $0x68] sm:$0x1] %vm193, 0
          %219 = vst.msk [vmem:[#allocation3 + $0x6c] sm:$0xf] %vm190, 0
          %220 = vst.msk [vmem:[#allocation3 + $0x70] sm:$0xf] %vm190, 0
          %221 = vst.msk [vmem:[#allocation3 + $0x74] sm:$0x1] %vm193, 0
          %222 = vst.msk [vmem:[#allocation3 + $0x78] sm:$0xf] %vm190, 0
          %223 = vst.msk [vmem:[#allocation3 + $0x7c] sm:$0xf] %vm190, 0
          %224 = vst.msk [vmem:[#allocation3 + $0x80] sm:$0x1] %vm193, 0
          %225 = vst.msk [vmem:[#allocation3 + $0x84] sm:$0xf] %vm190, 0
          %226 = vst.msk [vmem:[#allocation3 + $0x88] sm:$0xf] %vm190, 0
          %227 = vst.msk [vmem:[#allocation3 + $0x8c] sm:$0x1] %vm193, 0
          %228 = vst.msk [vmem:[#allocation3 + $0x90] sm:$0xf] %vm190, 0
          %229 = vst.msk [vmem:[#allocation3 + $0x94] sm:$0xf] %vm190, 0
          %230 = vst.msk [vmem:[#allocation3 + $0x98] sm:$0x1] %vm193, 0
          %231 = vst.msk [vmem:[#allocation3 + $0x9c] sm:$0xf] %vm190, 0
          %232 = vst.msk [vmem:[#allocation3 + $0xa0] sm:$0xf] %vm190, 0
          %233 = vst.msk [vmem:[#allocation3 + $0xa4] sm:$0x1] %vm193, 0
          %234 = vst.msk [vmem:[#allocation3 + $0xa8] sm:$0xf] %vm190, 0
          %235 = vst.msk [vmem:[#allocation3 + $0xac] sm:$0xf] %vm190, 0
          %236 = vst.msk [vmem:[#allocation3 + $0xb0] sm:$0x1] %vm193, 0
          %237 = vst.msk [vmem:[#allocation3 + $0xb4] sm:$0xf] %vm190, 0
          %238 = vst.msk [vmem:[#allocation3 + $0xb8] sm:$0xf] %vm190, 0
          %239 = vst.msk [vmem:[#allocation3 + $0xbc] sm:$0x1] %vm193, 0
          %240 = vst.msk [vmem:[#allocation3 + $0xc0] sm:$0xf] %vm190, 0
          %241 = vst.msk [vmem:[#allocation3 + $0xc4] sm:$0xf] %vm190, 0
          %242 = vst.msk [vmem:[#allocation3 + $0xc8] sm:$0x1] %vm193, 0
          %243 = vst.msk [vmem:[#allocation3 + $0xcc] sm:$0xf] %vm190, 0
          %244 = vst.msk [vmem:[#allocation3 + $0xd0] sm:$0xf] %vm190, 0
          %245 = vst.msk [vmem:[#allocation3 + $0xd4] sm:$0x1] %vm193, 0
          %v246 = vld [vmem:[%s182] sm:$0xf]
          %v247 = vld [vmem:[%s182 + $0x4] sm:$0xf]
          %v248 = vld [vmem:[%s182 + $0x8] sm:$0xf]
          %v249 = vld [vmem:[%s182 + $0xc] sm:$0xf]
          %v250 = vld [vmem:[%s182 + $0x10] sm:$0xf]
          %v251 = vld [vmem:[%s182 + $0x14] sm:$0xf]
          %v252 = vld [vmem:[%s182 + $0x18] sm:$0xf]
          %v253 = vld [vmem:[%s182 + $0x1c] sm:$0xf]
          %v254 = vld [vmem:[%s182 + $0x20] sm:$0xf]
          %v255 = vld [vmem:[%s182 + $0x24] sm:$0xf]
          %v256 = vld [vmem:[%s182 + $0x28] sm:$0xf]
          %v257 = vld [vmem:[%s182 + $0x2c] sm:$0xf]
          %v258 = vld [vmem:[%s182 + $0x30] sm:$0xf]
          %v259 = vld [vmem:[%s182 + $0x34] sm:$0xf]
          %v260 = vld [vmem:[%s182 + $0x38] sm:$0xf]
          %v261 = vld [vmem:[%s182 + $0x3c] sm:$0xf]
          %v262 = vld [vmem:[%s182 + $0x40] sm:$0xf]
          %v263 = vld [vmem:[%s182 + $0x44] sm:$0xf]
          %v264 = vld [vmem:[%s182 + $0x48] sm:$0xf]
          %v265 = vld [vmem:[%s182 + $0x4c] sm:$0xf]
          %v266 = vld [vmem:[%s182 + $0x50] sm:$0xf]
          %v267 = vld [vmem:[%s182 + $0x54] sm:$0xf]
          %v268 = vld [vmem:[%s182 + $0x58] sm:$0xf]
          %v269 = vld [vmem:[%s182 + $0x5c] sm:$0xf]
          %v270 = vld [vmem:[%s182 + $0x60] sm:$0xf]
          %v271 = vld [vmem:[%s182 + $0x64] sm:$0xf]
          %v272 = vld [vmem:[%s182 + $0x68] sm:$0xf]
          %v273 = vld [vmem:[%s182 + $0x6c] sm:$0xf]
          %v274 = vld [vmem:[%s182 + $0x70] sm:$0xf]
          %v275 = vld [vmem:[%s182 + $0x74] sm:$0xf]
          %v276 = vld [vmem:[%s182 + $0x78] sm:$0xf]
          %v277 = vld [vmem:[%s182 + $0x7c] sm:$0xf]
          %vm278 = vsmask.f32 256
          %vm279 = vsmask.f32 4368
          %vm280 = vmor %vm278, %vm279
          %v282 = vshrl.u32 %v246, 16
          %v284 = vrot.slane %v282, 7
          %v285 = vshll.u32 %v246, 16
          %v287 = vor.u32 %v284, %v285
          %v288 = vrot.slane %v284, 4
          %v290 = vshrl.u32 %v247, 16
          %v292 = vrot.slane %v290, 7
          %v293 = vshll.u32 %v247, 16
          %v295 = vor.u32 %v292, %v293
          %v296 = vsel %vm280, %v288, %v295
          %v297 = vrot.slane %v292, 4
          %v299 = vshrl.u32 %v248, 16
          %v301 = vrot.slane %v299, 7
          %v302 = vshll.u32 %v248, 16
          %v304 = vor.u32 %v301, %v302
          %v305 = vrot.slane %v301, 4
          %v307 = vshrl.u32 %v249, 16
          %v309 = vrot.slane %v307, 7
          %v310 = vshll.u32 %v249, 16
          %v312 = vor.u32 %v309, %v310
          %v313 = vsel %vm280, %v305, %v312
          %v314 = vrot.slane %v309, 4
          %v316 = vshrl.u32 %v250, 16
          %v318 = vrot.slane %v316, 7
          %v319 = vshll.u32 %v250, 16
          %v321 = vor.u32 %v318, %v319
          %v322 = vrot.slane %v318, 4
          %v324 = vshrl.u32 %v251, 16
          %v326 = vrot.slane %v324, 7
          %v327 = vshll.u32 %v251, 16
          %v329 = vor.u32 %v326, %v327
          %v330 = vsel %vm280, %v322, %v329
          %v331 = vrot.slane %v326, 4
          %v333 = vshrl.u32 %v252, 16
          %v335 = vrot.slane %v333, 7
          %v336 = vshll.u32 %v252, 16
          %v338 = vor.u32 %v335, %v336
          %v339 = vrot.slane %v335, 4
          %v341 = vshrl.u32 %v253, 16
          %v343 = vrot.slane %v341, 7
          %v344 = vshll.u32 %v253, 16
          %v346 = vor.u32 %v343, %v344
          %v347 = vsel %vm280, %v339, %v346
          %v348 = vrot.slane %v343, 4
          %v350 = vshrl.u32 %v254, 16
          %v352 = vrot.slane %v350, 7
          %v353 = vshll.u32 %v254, 16
          %v355 = vor.u32 %v352, %v353
          %v356 = vrot.slane %v352, 4
          %v358 = vshrl.u32 %v255, 16
          %v360 = vrot.slane %v358, 7
          %v361 = vshll.u32 %v255, 16
          %v363 = vor.u32 %v360, %v361
          %v364 = vsel %vm280, %v356, %v363
          %v365 = vrot.slane %v360, 4
          %v367 = vshrl.u32 %v256, 16
          %v369 = vrot.slane %v367, 7
          %v370 = vshll.u32 %v256, 16
          %v372 = vor.u32 %v369, %v370
          %v373 = vrot.slane %v369, 4
          %v375 = vshrl.u32 %v257, 16
          %v377 = vrot.slane %v375, 7
          %v378 = vshll.u32 %v257, 16
          %v380 = vor.u32 %v377, %v378
          %v381 = vsel %vm280, %v373, %v380
          %v382 = vrot.slane %v377, 4
          %v384 = vshrl.u32 %v258, 16
          %v386 = vrot.slane %v384, 7
          %v387 = vshll.u32 %v258, 16
          %v389 = vor.u32 %v386, %v387
          %v390 = vrot.slane %v386, 4
          %v392 = vshrl.u32 %v259, 16
          %v394 = vrot.slane %v392, 7
          %v395 = vshll.u32 %v259, 16
          %v397 = vor.u32 %v394, %v395
          %v398 = vsel %vm280, %v390, %v397
          %v399 = vrot.slane %v394, 4
          %v401 = vshrl.u32 %v260, 16
          %v403 = vrot.slane %v401, 7
          %v404 = vshll.u32 %v260, 16
          %v406 = vor.u32 %v403, %v404
          %v407 = vrot.slane %v403, 4
          %v409 = vshrl.u32 %v261, 16
          %v411 = vrot.slane %v409, 7
          %v412 = vshll.u32 %v261, 16
          %v414 = vor.u32 %v411, %v412
          %v415 = vsel %vm280, %v407, %v414
          %v416 = vrot.slane %v411, 4
          %v418 = vshrl.u32 %v262, 16
          %v420 = vrot.slane %v418, 7
          %v421 = vshll.u32 %v262, 16
          %v423 = vor.u32 %v420, %v421
          %v424 = vrot.slane %v420, 4
          %v426 = vshrl.u32 %v263, 16
          %v428 = vrot.slane %v426, 7
          %v429 = vshll.u32 %v263, 16
          %v431 = vor.u32 %v428, %v429
          %v432 = vsel %vm280, %v424, %v431
          %v433 = vrot.slane %v428, 4
          %v435 = vshrl.u32 %v264, 16
          %v437 = vrot.slane %v435, 7
          %v438 = vshll.u32 %v264, 16
          %v440 = vor.u32 %v437, %v438
          %v441 = vrot.slane %v437, 4
          %v443 = vshrl.u32 %v265, 16
          %v445 = vrot.slane %v443, 7
          %v446 = vshll.u32 %v265, 16
          %v448 = vor.u32 %v445, %v446
          %v449 = vsel %vm280, %v441, %v448
          %v450 = vrot.slane %v445, 4
          %v452 = vshrl.u32 %v266, 16
          %v454 = vrot.slane %v452, 7
          %v455 = vshll.u32 %v266, 16
          %v457 = vor.u32 %v454, %v455
          %v458 = vrot.slane %v454, 4
          %v460 = vshrl.u32 %v267, 16
          %v462 = vrot.slane %v460, 7
          %v463 = vshll.u32 %v267, 16
          %v465 = vor.u32 %v462, %v463
          %v466 = vsel %vm280, %v458, %v465
          %v467 = vrot.slane %v462, 4
          %v469 = vshrl.u32 %v268, 16
          %v471 = vrot.slane %v469, 7
          %v472 = vshll.u32 %v268, 16
          %v474 = vor.u32 %v471, %v472
          %v475 = vrot.slane %v471, 4
          %v477 = vshrl.u32 %v269, 16
          %v479 = vrot.slane %v477, 7
          %v480 = vshll.u32 %v269, 16
          %v482 = vor.u32 %v479, %v480
          %v483 = vsel %vm280, %v475, %v482
          %v484 = vrot.slane %v479, 4
          %v486 = vshrl.u32 %v270, 16
          %v488 = vrot.slane %v486, 7
          %v489 = vshll.u32 %v270, 16
          %v491 = vor.u32 %v488, %v489
          %v492 = vrot.slane %v488, 4
          %v494 = vshrl.u32 %v271, 16
          %v496 = vrot.slane %v494, 7
          %v497 = vshll.u32 %v271, 16
          %v499 = vor.u32 %v496, %v497
          %v500 = vsel %vm280, %v492, %v499
          %v501 = vrot.slane %v496, 4
          %v503 = vshrl.u32 %v272, 16
          %v505 = vrot.slane %v503, 7
          %v506 = vshll.u32 %v272, 16
          %v508 = vor.u32 %v505, %v506
          %v509 = vrot.slane %v505, 4
          %v511 = vshrl.u32 %v273, 16
          %v513 = vrot.slane %v511, 7
          %v514 = vshll.u32 %v273, 16
          %v516 = vor.u32 %v513, %v514
          %v517 = vsel %vm280, %v509, %v516
          %v518 = vrot.slane %v513, 4
          %v520 = vshrl.u32 %v274, 16
          %v522 = vrot.slane %v520, 7
          %v523 = vshll.u32 %v274, 16
          %v525 = vor.u32 %v522, %v523
          %v526 = vrot.slane %v522, 4
          %v528 = vshrl.u32 %v275, 16
          %v530 = vrot.slane %v528, 7
          %v531 = vshll.u32 %v275, 16
          %v533 = vor.u32 %v530, %v531
          %v534 = vsel %vm280, %v526, %v533
          %v535 = vrot.slane %v530, 4
          %v537 = vshrl.u32 %v276, 16
          %v539 = vrot.slane %v537, 7
          %v540 = vshll.u32 %v276, 16
          %v542 = vor.u32 %v539, %v540
          %v543 = vrot.slane %v539, 4
          %v545 = vshrl.u32 %v277, 16
          %v547 = vrot.slane %v545, 7
          %v548 = vshll.u32 %v277, 16
          %v550 = vor.u32 %v547, %v548
          %v551 = vsel %vm280, %v543, %v550
          %v552 = vrot.slane %v547, 4
          %s601 = scalar_lea.vmem [#allocation3], 12
          %vm602 = vcmask 27648
          %vm603 = vsmask.f32 7938
          %vm604 = vmand %vm602, %vm603
          %v605 = vld [vmem:[%s601] sm:$0xf]
          %v606 = vsel %vm604, %v287, %v605
          %607 = vst [vmem:[%s601] sm:$0xf] %v606
          %608 = vst.msk [vmem:[%s601 + $0x4] sm:$0xf] %vm190, %v296
          %vm609 = vcmask 24576
          %vm610 = vmand %vm609, %vm278
          %v611 = vld [vmem:[%s601 + $0x8] sm:$0x1]
          %v612 = vsel %vm610, %v297, %v611
          %613 = vst [vmem:[%s601 + $0x8] sm:$0x1] %v612
          %v614 = vld [vmem:[%s601 + $0xc] sm:$0xf]
          %v615 = vsel %vm604, %v304, %v614
          %616 = vst [vmem:[%s601 + $0xc] sm:$0xf] %v615
          %617 = vst.msk [vmem:[%s601 + $0x10] sm:$0xf] %vm190, %v313
          %v618 = vld [vmem:[%s601 + $0x14] sm:$0x1]
          %v619 = vsel %vm610, %v314, %v618
          %620 = vst [vmem:[%s601 + $0x14] sm:$0x1] %v619
          %v621 = vld [vmem:[%s601 + $0x18] sm:$0xf]
          %v622 = vsel %vm604, %v321, %v621
          %623 = vst [vmem:[%s601 + $0x18] sm:$0xf] %v622
          %624 = vst.msk [vmem:[%s601 + $0x1c] sm:$0xf] %vm190, %v330
          %v625 = vld [vmem:[%s601 + $0x20] sm:$0x1]
          %v626 = vsel %vm610, %v331, %v625
          %627 = vst [vmem:[%s601 + $0x20] sm:$0x1] %v626
          %v628 = vld [vmem:[%s601 + $0x24] sm:$0xf]
          %v629 = vsel %vm604, %v338, %v628
          %630 = vst [vmem:[%s601 + $0x24] sm:$0xf] %v629
          %631 = vst.msk [vmem:[%s601 + $0x28] sm:$0xf] %vm190, %v347
          %v632 = vld [vmem:[%s601 + $0x2c] sm:$0x1]
          %v633 = vsel %vm610, %v348, %v632
          %634 = vst [vmem:[%s601 + $0x2c] sm:$0x1] %v633
          %v635 = vld [vmem:[%s601 + $0x30] sm:$0xf]
          %v636 = vsel %vm604, %v355, %v635
          %637 = vst [vmem:[%s601 + $0x30] sm:$0xf] %v636
          %638 = vst.msk [vmem:[%s601 + $0x34] sm:$0xf] %vm190, %v364
          %v639 = vld [vmem:[%s601 + $0x38] sm:$0x1]
          %v640 = vsel %vm610, %v365, %v639
          %641 = vst [vmem:[%s601 + $0x38] sm:$0x1] %v640
          %v642 = vld [vmem:[%s601 + $0x3c] sm:$0xf]
          %v643 = vsel %vm604, %v372, %v642
          %644 = vst [vmem:[%s601 + $0x3c] sm:$0xf] %v643
          %645 = vst.msk [vmem:[%s601 + $0x40] sm:$0xf] %vm190, %v381
          %v646 = vld [vmem:[%s601 + $0x44] sm:$0x1]
          %v647 = vsel %vm610, %v382, %v646
          %648 = vst [vmem:[%s601 + $0x44] sm:$0x1] %v647
          %v649 = vld [vmem:[%s601 + $0x48] sm:$0xf]
          %v650 = vsel %vm604, %v389, %v649
          %651 = vst [vmem:[%s601 + $0x48] sm:$0xf] %v650
          %652 = vst.msk [vmem:[%s601 + $0x4c] sm:$0xf] %vm190, %v398
          %v653 = vld [vmem:[%s601 + $0x50] sm:$0x1]
          %v654 = vsel %vm610, %v399, %v653
          %655 = vst [vmem:[%s601 + $0x50] sm:$0x1] %v654
          %v656 = vld [vmem:[%s601 + $0x54] sm:$0xf]
          %v657 = vsel %vm604, %v406, %v656
          %658 = vst [vmem:[%s601 + $0x54] sm:$0xf] %v657
          %659 = vst.msk [vmem:[%s601 + $0x58] sm:$0xf] %vm190, %v415
          %v660 = vld [vmem:[%s601 + $0x5c] sm:$0x1]
          %v661 = vsel %vm610, %v416, %v660
          %662 = vst [vmem:[%s601 + $0x5c] sm:$0x1] %v661
          %v663 = vld [vmem:[%s601 + $0x60] sm:$0xf]
          %v664 = vsel %vm604, %v423, %v663
          %665 = vst [vmem:[%s601 + $0x60] sm:$0xf] %v664
          %666 = vst.msk [vmem:[%s601 + $0x64] sm:$0xf] %vm190, %v432
          %v667 = vld [vmem:[%s601 + $0x68] sm:$0x1]
          %v668 = vsel %vm610, %v433, %v667
          %669 = vst [vmem:[%s601 + $0x68] sm:$0x1] %v668
          %v670 = vld [vmem:[%s601 + $0x6c] sm:$0xf]
          %v671 = vsel %vm604, %v440, %v670
          %672 = vst [vmem:[%s601 + $0x6c] sm:$0xf] %v671
          %673 = vst.msk [vmem:[%s601 + $0x70] sm:$0xf] %vm190, %v449
          %v674 = vld [vmem:[%s601 + $0x74] sm:$0x1]
          %v675 = vsel %vm610, %v450, %v674
          %676 = vst [vmem:[%s601 + $0x74] sm:$0x1] %v675
          %v677 = vld [vmem:[%s601 + $0x78] sm:$0xf]
          %v678 = vsel %vm604, %v457, %v677
          %679 = vst [vmem:[%s601 + $0x78] sm:$0xf] %v678
          %680 = vst.msk [vmem:[%s601 + $0x7c] sm:$0xf] %vm190, %v466
          %v681 = vld [vmem:[%s601 + $0x80] sm:$0x1]
          %v682 = vsel %vm610, %v467, %v681
          %683 = vst [vmem:[%s601 + $0x80] sm:$0x1] %v682
          %v684 = vld [vmem:[%s601 + $0x84] sm:$0xf]
          %v685 = vsel %vm604, %v474, %v684
          %686 = vst [vmem:[%s601 + $0x84] sm:$0xf] %v685
          %687 = vst.msk [vmem:[%s601 + $0x88] sm:$0xf] %vm190, %v483
          %v688 = vld [vmem:[%s601 + $0x8c] sm:$0x1]
          %v689 = vsel %vm610, %v484, %v688
          %690 = vst [vmem:[%s601 + $0x8c] sm:$0x1] %v689
          %v691 = vld [vmem:[%s601 + $0x90] sm:$0xf]
          %v692 = vsel %vm604, %v491, %v691
          %693 = vst [vmem:[%s601 + $0x90] sm:$0xf] %v692
          %694 = vst.msk [vmem:[%s601 + $0x94] sm:$0xf] %vm190, %v500
          %v695 = vld [vmem:[%s601 + $0x98] sm:$0x1]
          %v696 = vsel %vm610, %v501, %v695
          %697 = vst [vmem:[%s601 + $0x98] sm:$0x1] %v696
          %v698 = vld [vmem:[%s601 + $0x9c] sm:$0xf]
          %v699 = vsel %vm604, %v508, %v698
          %700 = vst [vmem:[%s601 + $0x9c] sm:$0xf] %v699
          %701 = vst.msk [vmem:[%s601 + $0xa0] sm:$0xf] %vm190, %v517
          %v702 = vld [vmem:[%s601 + $0xa4] sm:$0x1]
          %v703 = vsel %vm610, %v518, %v702
          %704 = vst [vmem:[%s601 + $0xa4] sm:$0x1] %v703
          %v705 = vld [vmem:[%s601 + $0xa8] sm:$0xf]
          %v706 = vsel %vm604, %v525, %v705
          %707 = vst [vmem:[%s601 + $0xa8] sm:$0xf] %v706
          %708 = vst.msk [vmem:[%s601 + $0xac] sm:$0xf] %vm190, %v534
          %v709 = vld [vmem:[%s601 + $0xb0] sm:$0x1]
          %v710 = vsel %vm610, %v535, %v709
          %711 = vst [vmem:[%s601 + $0xb0] sm:$0x1] %v710
          %v712 = vld [vmem:[%s601 + $0xb4] sm:$0xf]
          %v713 = vsel %vm604, %v542, %v712
          %714 = vst [vmem:[%s601 + $0xb4] sm:$0xf] %v713
          %715 = vst.msk [vmem:[%s601 + $0xb8] sm:$0xf] %vm190, %v551
          %v716 = vld [vmem:[%s601 + $0xbc] sm:$0x1]
          %v717 = vsel %vm610, %v552, %v716
          %718 = vst [vmem:[%s601 + $0xbc] sm:$0x1] %v717
        $region36: #{tpu_custom_call.1} parent=31 // pred_fallthru
          _
        %s719 = smul.u32 %s185, 3
        %s720 = smul.addr %s719, 4
        %s721 = scalar_lea.vmem [#allocation3], %s720
        %v722 = vld [vmem:[%s721] sm:$0xf]
        %v723 = vld [vmem:[%s721 + $0x4] sm:$0xf]
        %v724 = vld [vmem:[%s721 + $0xc] sm:$0xf]
        %v725 = vld [vmem:[%s721 + $0x10] sm:$0xf]
        %v726 = vld [vmem:[%s721 + $0x18] sm:$0xf]
        %v727 = vld [vmem:[%s721 + $0x1c] sm:$0xf]
        %v728 = vld [vmem:[%s721 + $0x24] sm:$0xf]
        %v729 = vld [vmem:[%s721 + $0x28] sm:$0xf]
        %v730 = vld [vmem:[%s1] sm:$0x3]
        %v739 = vunpack.c.l.b16 %v722
        %v740 = vunpack.c.l.b16 %v723
        %v741 = vunpack.c.l.b16 %v724
        %v742 = vunpack.c.l.b16 %v725
        %v743 = vunpack.c.l.b16 %v726
        %v744 = vunpack.c.l.b16 %v727
        %v745 = vunpack.c.l.b16 %v728
        %v746 = vunpack.c.l.b16 %v729
        %v747 = vpack.c.b16 %v740, %v739
        %v748 = vpack.c.b16 %v742, %v741
        %v749 = vpack.c.b16 %v744, %v743
        %v750 = vpack.c.b16 %v746, %v745
        %vm751 = vcmask 31744
        %v753 = vsel %vm751, %v747, 0
        %v756 = vsel %vm751, %v748, 0
        %v759 = vsel %vm751, %v749, 0
        %v762 = vsel %vm751, %v750, 0
        %vm764 = vcmask 1041408
        %v766 = vsel %vm764, %v730, 0
        %768 = vmatprep.subr.bf16.mxu0 0
        %769 = vmatpush1.bf16.msra.mxu0 %v766
        %770 = vmatprep.subr.bf16.mxu0 0
        %771 = vmatpush1.bf16.msra.mxu0 0
        %772 = vmatprep.subr.bf16.mxu0 0
        %773 = vmatpush1.bf16.msra.mxu0 0
        %774 = vmatprep.subr.bf16.mxu0 0
        %775 = vmatpush1.bf16.msra.mxu0 0
        %776 = vmatprep.subr.bf16.mxu0 0
        %777 = vmatpush1.bf16.msra.mxu0 0
        %778 = vmatprep.subr.bf16.mxu0 0
        %779 = vmatpush1.bf16.msra.mxu0 0
        %780 = vmatprep.subr.bf16.mxu0 0
        %781 = vmatpush1.bf16.msra.mxu0 0
        %782 = vmatprep.subr.bf16.mxu0 0
        %783 = vmatpush1.bf16.msra.mxu0 0
        %784 = vmatprep.subr.bf16.mxu0 0
        %785 = vmatpush1.bf16.msra.mxu0 0
        %786 = vmatprep.subr.bf16.mxu0 0
        %787 = vmatpush1.bf16.msra.mxu0 0
        %788 = vmatprep.subr.bf16.mxu0 0
        %789 = vmatpush1.bf16.msra.mxu0 0
        %790 = vmatprep.subr.bf16.mxu0 0
        %791 = vmatpush1.bf16.msra.mxu0 0
        %792 = vmatprep.subr.bf16.mxu0 0
        %793 = vmatpush1.bf16.msra.mxu0 0
        %794 = vmatprep.subr.bf16.mxu0 0
        %795 = vmatpush1.bf16.msra.mxu0 0
        %796 = vmatprep.subr.bf16.mxu0 0
        %797 = vmatpush1.bf16.msra.mxu0 0
        %798 = vmatprep.subr.bf16.mxu0 0
        %799 = vmatpush1.bf16.msra.mxu0 0
        %800 = vmatprep.mubr.bf16.mxu0 0
        %801 = vmatmul.mubr.bf16.gmra.mrb[0].mxu0 %v753
        %v802 = vpop.f32.mrb[0].mxu0
        %v803 = vadd.f32 0.0, %v802
        %v804 = vpop.f32.mrb[0].mxu0
        %v805 = vpop.f32.mrb[0].mxu0
        %v806 = vadd.f32 0.0, %v805
        %v807 = vpop.f32.mrb[0].mxu0
        %808 = vmatprep.mubr.bf16.mxu0 0
        %809 = vmatmul.mubr.bf16.gmra.mrb[0].mxu0 %v756
        %v810 = vpop.f32.mrb[0].mxu0
        %v811 = vadd.f32 0.0, %v810
        %v812 = vpop.f32.mrb[0].mxu0
        %v813 = vpop.f32.mrb[0].mxu0
        %v814 = vadd.f32 0.0, %v813
        %v815 = vpop.f32.mrb[0].mxu0
        %816 = vmatprep.mubr.bf16.mxu0 0
        %817 = vmatmul.mubr.bf16.gmra.mrb[0].mxu0 %v759
        %v818 = vpop.f32.mrb[0].mxu0
        %v819 = vadd.f32 0.0, %v818
        %v820 = vpop.f32.mrb[0].mxu0
        %v821 = vpop.f32.mrb[0].mxu0
        %v822 = vadd.f32 0.0, %v821
        %v823 = vpop.f32.mrb[0].mxu0
        %824 = vmatprep.mubr.bf16.mxu0 0
        %825 = vmatmul.mubr.bf16.gmra.mrb[0].mxu0 %v762
        %v826 = vpop.f32.mrb[0].mxu0
        %v827 = vadd.f32 0.0, %v826
        %v828 = vpop.f32.mrb[0].mxu0
        %v829 = vpop.f32.mrb[0].mxu0
        %v830 = vadd.f32 0.0, %v829
        %v831 = vpop.f32.mrb[0].mxu0
        %832 = vdwg.mxu0
        %833 = vst [vmem:[#allocation2] sm:$0xff] %v803
        %834 = vst [vmem:[#allocation2 + $0x8] sm:$0xff] %v806
        %835 = vst [vmem:[#allocation2 + $0x10] sm:$0xff] %v811
        %836 = vst [vmem:[#allocation2 + $0x18] sm:$0xff] %v814
        %837 = vst [vmem:[#allocation2 + $0x20] sm:$0xff] %v819
        %838 = vst [vmem:[#allocation2 + $0x28] sm:$0xff] %v822
        %839 = vst [vmem:[#allocation2 + $0x30] sm:$0xff] %v827
        %840 = vst [vmem:[#allocation2 + $0x38] sm:$0xff] %v830
        %v841 = vld [vmem:[%s721] sm:$0xf]
        %v842 = vld [vmem:[%s721 + $0x4] sm:$0xf]
        %v843 = vld [vmem:[%s721 + $0x8] sm:$0x1]
        %v844 = vld [vmem:[%s721 + $0xc] sm:$0xf]
        %v845 = vld [vmem:[%s721 + $0x10] sm:$0xf]
        %v846 = vld [vmem:[%s721 + $0x14] sm:$0x1]
        %v847 = vld [vmem:[%s721 + $0x18] sm:$0xf]
        %v848 = vld [vmem:[%s721 + $0x1c] sm:$0xf]
        %v849 = vld [vmem:[%s721 + $0x20] sm:$0x1]
        %v850 = vld [vmem:[%s721 + $0x24] sm:$0xf]
        %v851 = vld [vmem:[%s721 + $0x28] sm:$0xf]
        %v852 = vld [vmem:[%s721 + $0x2c] sm:$0x1]
        %vm853 = vsmask.f32 3328
        %vm854 = vsmask.f32 7440
        %vm855 = vmor %vm853, %vm854
        %v857 = vshrl.u32 %v841, 16
        %v859 = vrot.slane %v857, 4
        %v860 = vshll.u32 %v841, 16
        %v862 = vrot.slane %v860, 5
        %v863 = vor.u32 %v859, %v862
        %v864 = vrot.slane %v863, 4
        %v866 = vshll.u32 %v842, 16
        %v868 = vrot.slane %v866, 5
        %v869 = vsel %vm855, %v864, %v868
        %v870 = vshrl.u32 %v842, 16
        %v872 = vrot.slane %v870, 4
        %v873 = vor.u32 %v872, %v868
        %v874 = vrot.slane %v873, 4
        %v876 = vshll.u32 %v843, 16
        %v878 = vrot.slane %v876, 5
        %v879 = vsel %vm855, %v874, %v878
        %v881 = vshrl.u32 %v844, 16
        %v883 = vrot.slane %v881, 4
        %v884 = vshll.u32 %v844, 16
        %v886 = vrot.slane %v884, 5
        %v887 = vor.u32 %v883, %v886
        %v888 = vrot.slane %v887, 4
        %v890 = vshll.u32 %v845, 16
        %v892 = vrot.slane %v890, 5
        %v893 = vsel %vm855, %v888, %v892
        %v894 = vshrl.u32 %v845, 16
        %v896 = vrot.slane %v894, 4
        %v897 = vor.u32 %v896, %v892
        %v898 = vrot.slane %v897, 4
        %v900 = vshll.u32 %v846, 16
        %v902 = vrot.slane %v900, 5
        %v903 = vsel %vm855, %v898, %v902
        %v905 = vshrl.u32 %v847, 16
        %v907 = vrot.slane %v905, 4
        %v908 = vshll.u32 %v847, 16
        %v910 = vrot.slane %v908, 5
        %v911 = vor.u32 %v907, %v910
        %v912 = vrot.slane %v911, 4
        %v914 = vshll.u32 %v848, 16
        %v916 = vrot.slane %v914, 5
        %v917 = vsel %vm855, %v912, %v916
        %v918 = vshrl.u32 %v848, 16
        %v920 = vrot.slane %v918, 4
        %v921 = vor.u32 %v920, %v916
        %v922 = vrot.slane %v921, 4
        %v924 = vshll.u32 %v849, 16
        %v926 = vrot.slane %v924, 5
        %v927 = vsel %vm855, %v922, %v926
        %v929 = vshrl.u32 %v850, 16
        %v931 = vrot.slane %v929, 4
        %v932 = vshll.u32 %v850, 16
        %v934 = vrot.slane %v932, 5
        %v935 = vor.u32 %v931, %v934
        %v936 = vrot.slane %v935, 4
        %v938 = vshll.u32 %v851, 16
        %v940 = vrot.slane %v938, 5
        %v941 = vsel %vm855, %v936, %v940
        %v942 = vshrl.u32 %v851, 16
        %v944 = vrot.slane %v942, 4
        %v945 = vor.u32 %v944, %v940
        %v946 = vrot.slane %v945, 4
        %v948 = vshll.u32 %v852, 16
        %v950 = vrot.slane %v948, 5
        %v951 = vsel %vm855, %v946, %v950
        %s952 = scalar_lea.vmem %s1, 2
        %v953 = vld [vmem:[%s952] sm:$0x3]
        %v954 = vunpack.c.l.b16 %v869
        %v955 = vunpack.c.l.b16 %v879
        %v956 = vunpack.c.l.b16 %v893
        %v957 = vunpack.c.l.b16 %v903
        %v958 = vunpack.c.l.b16 %v917
        %v959 = vunpack.c.l.b16 %v927
        %v960 = vunpack.c.l.b16 %v941
        %v961 = vunpack.c.l.b16 %v951
        %v962 = vpack.c.b16 %v955, %v954
        %v963 = vpack.c.b16 %v957, %v956
        %v964 = vpack.c.b16 %v959, %v958
        %v965 = vpack.c.b16 %v961, %v960
        %v967 = vsel %vm751, %v962, 0
        %v970 = vsel %vm751, %v963, 0
        %v973 = vsel %vm751, %v964, 0
        %v976 = vsel %vm751, %v965, 0
        %v979 = vsel %vm764, %v953, 0
        %981 = vmatprep.subr.bf16.mxu0 0
        %982 = vmatpush1.bf16.msra.mxu0 %v979
        %983 = vmatprep.subr.bf16.mxu0 0
        %984 = vmatpush1.bf16.msra.mxu0 0
        %985 = vmatprep.subr.bf16.mxu0 0
        %986 = vmatpush1.bf16.msra.mxu0 0
        %987 = vmatprep.subr.bf16.mxu0 0
        %988 = vmatpush1.bf16.msra.mxu0 0
        %989 = vmatprep.subr.bf16.mxu0 0
        %990 = vmatpush1.bf16.msra.mxu0 0
        %991 = vmatprep.subr.bf16.mxu0 0
        %992 = vmatpush1.bf16.msra.mxu0 0
        %993 = vmatprep.subr.bf16.mxu0 0
        %994 = vmatpush1.bf16.msra.mxu0 0
        %995 = vmatprep.subr.bf16.mxu0 0
        %996 = vmatpush1.bf16.msra.mxu0 0
        %997 = vmatprep.subr.bf16.mxu0 0
        %998 = vmatpush1.bf16.msra.mxu0 0
        %999 = vmatprep.subr.bf16.mxu0 0
        %1000 = vmatpush1.bf16.msra.mxu0 0
        %1001 = vmatprep.subr.bf16.mxu0 0
        %1002 = vmatpush1.bf16.msra.mxu0 0
        %1003 = vmatprep.subr.bf16.mxu0 0
        %1004 = vmatpush1.bf16.msra.mxu0 0
        %1005 = vmatprep.subr.bf16.mxu0 0
        %1006 = vmatpush1.bf16.msra.mxu0 0
        %1007 = vmatprep.subr.bf16.mxu0 0
        %1008 = vmatpush1.bf16.msra.mxu0 0
        %1009 = vmatprep.subr.bf16.mxu0 0
        %1010 = vmatpush1.bf16.msra.mxu0 0
        %1011 = vmatprep.subr.bf16.mxu0 0
        %1012 = vmatpush1.bf16.msra.mxu0 0
        %1013 = vmatprep.mubr.bf16.mxu0 0
        %1014 = vmatmul.mubr.bf16.gmra.mrb[0].mxu0 %v967
        %v1015 = vpop.f32.mrb[0].mxu0
        %v1016 = vadd.f32 0.0, %v1015
        %v1017 = vpop.f32.mrb[0].mxu0
        %v1018 = vpop.f32.mrb[0].mxu0
        %v1019 = vadd.f32 0.0, %v1018
        %v1020 = vpop.f32.mrb[0].mxu0
        %1021 = vmatprep.mubr.bf16.mxu0 0
        %1022 = vmatmul.mubr.bf16.gmra.mrb[0].mxu0 %v970
        %v1023 = vpop.f32.mrb[0].mxu0
        %v1024 = vadd.f32 0.0, %v1023
        %v1025 = vpop.f32.mrb[0].mxu0
        %v1026 = vpop.f32.mrb[0].mxu0
        %v1027 = vadd.f32 0.0, %v1026
        %v1028 = vpop.f32.mrb[0].mxu0
        %1029 = vmatprep.mubr.bf16.mxu0 0
        %1030 = vmatmul.mubr.bf16.gmra.mrb[0].mxu0 %v973
        %v1031 = vpop.f32.mrb[0].mxu0
        %v1032 = vadd.f32 0.0, %v1031
        %v1033 = vpop.f32.mrb[0].mxu0
        %v1034 = vpop.f32.mrb[0].mxu0
        %v1035 = vadd.f32 0.0, %v1034
        %v1036 = vpop.f32.mrb[0].mxu0
        %1037 = vmatprep.mubr.bf16.mxu0 0
        %1038 = vmatmul.mubr.bf16.gmra.mrb[0].mxu0 %v976
        %v1039 = vpop.f32.mrb[0].mxu0
        %v1040 = vadd.f32 0.0, %v1039
        %v1041 = vpop.f32.mrb[0].mxu0
        %v1042 = vpop.f32.mrb[0].mxu0
        %v1043 = vadd.f32 0.0, %v1042
        %v1044 = vpop.f32.mrb[0].mxu0
        %1045 = vdwg.mxu0
        %v1046 = vld [vmem:[#allocation2] sm:$0xff]
        %v1047 = vld [vmem:[#allocation2 + $0x8] sm:$0xff]
        %v1048 = vld [vmem:[#allocation2 + $0x10] sm:$0xff]
        %v1049 = vld [vmem:[#allocation2 + $0x18] sm:$0xff]
        %v1050 = vld [vmem:[#allocation2 + $0x20] sm:$0xff]
        %v1051 = vld [vmem:[#allocation2 + $0x28] sm:$0xff]
        %v1052 = vld [vmem:[#allocation2 + $0x30] sm:$0xff]
        %v1053 = vld [vmem:[#allocation2 + $0x38] sm:$0xff]
        %v1054 = vadd.f32 %v1046, %v1016
        %v1055 = vadd.f32 %v1047, %v1019
        %v1056 = vadd.f32 %v1048, %v1024
        %v1057 = vadd.f32 %v1049, %v1027
        %v1058 = vadd.f32 %v1050, %v1032
        %v1059 = vadd.f32 %v1051, %v1035
        %v1060 = vadd.f32 %v1052, %v1040
        %v1061 = vadd.f32 %v1053, %v1043
        %1062 = vst [vmem:[#allocation2] sm:$0xff] %v1054
        %1063 = vst [vmem:[#allocation2 + $0x8] sm:$0xff] %v1055
        %1064 = vst [vmem:[#allocation2 + $0x10] sm:$0xff] %v1056
        %1065 = vst [vmem:[#allocation2 + $0x18] sm:$0xff] %v1057
        %1066 = vst [vmem:[#allocation2 + $0x20] sm:$0xff] %v1058
        %1067 = vst [vmem:[#allocation2 + $0x28] sm:$0xff] %v1059
        %1068 = vst [vmem:[#allocation2 + $0x30] sm:$0xff] %v1060
        %1069 = vst [vmem:[#allocation2 + $0x38] sm:$0xff] %v1061
        %v1070 = vld [vmem:[%s721] sm:$0xe]
        %v1071 = vld [vmem:[%s721 + $0x4] sm:$0xf]
        %v1072 = vld [vmem:[%s721 + $0x8] sm:$0x1]
        %v1073 = vld [vmem:[%s721 + $0xc] sm:$0xe]
        %v1074 = vld [vmem:[%s721 + $0x10] sm:$0xf]
        %v1075 = vld [vmem:[%s721 + $0x14] sm:$0x1]
        %v1076 = vld [vmem:[%s721 + $0x18] sm:$0xe]
        %v1077 = vld [vmem:[%s721 + $0x1c] sm:$0xf]
        %v1078 = vld [vmem:[%s721 + $0x20] sm:$0x1]
        %v1079 = vld [vmem:[%s721 + $0x24] sm:$0xe]
        %v1080 = vld [vmem:[%s721 + $0x28] sm:$0xf]
        %v1081 = vld [vmem:[%s721 + $0x2c] sm:$0x1]
        %vm1094 = vcmask 1042432
        %vm1095 = vcmask 1046532
        %vm1096 = vmor %vm1094, %vm1095
        %v1097 = vrot.slane %v1070, 5
        %v1098 = vrot.slane %v1097, 4
        %v1099 = vrot.slane %v1071, 5
        %v1100 = vsel %vm1096, %v1098, %v1099
        %v1101 = vrot.slane %v1099, 4
        %v1102 = vrot.slane %v1072, 5
        %v1103 = vsel %vm1096, %v1101, %v1102
        %v1104 = vrot.slane %v1073, 5
        %v1105 = vrot.slane %v1104, 4
        %v1106 = vrot.slane %v1074, 5
        %v1107 = vsel %vm1096, %v1105, %v1106
        %v1108 = vrot.slane %v1106, 4
        %v1109 = vrot.slane %v1075, 5
        %v1110 = vsel %vm1096, %v1108, %v1109
        %v1111 = vrot.slane %v1076, 5
        %v1112 = vrot.slane %v1111, 4
        %v1113 = vrot.slane %v1077, 5
        %v1114 = vsel %vm1096, %v1112, %v1113
        %v1115 = vrot.slane %v1113, 4
        %v1116 = vrot.slane %v1078, 5
        %v1117 = vsel %vm1096, %v1115, %v1116
        %v1118 = vrot.slane %v1079, 5
        %v1119 = vrot.slane %v1118, 4
        %v1120 = vrot.slane %v1080, 5
        %v1121 = vsel %vm1096, %v1119, %v1120
        %v1122 = vrot.slane %v1120, 4
        %v1123 = vrot.slane %v1081, 5
        %v1124 = vsel %vm1096, %v1122, %v1123
        %s1125 = scalar_lea.vmem %s1, 4
        %v1126 = vld [vmem:[%s1125] sm:$0x3]
        %v1127 = vunpack.c.l.b16 %v1100
        %v1128 = vunpack.c.l.b16 %v1103
        %v1129 = vunpack.c.l.b16 %v1107
        %v1130 = vunpack.c.l.b16 %v1110
        %v1131 = vunpack.c.l.b16 %v1114
        %v1132 = vunpack.c.l.b16 %v1117
        %v1133 = vunpack.c.l.b16 %v1121
        %v1134 = vunpack.c.l.b16 %v1124
        %v1135 = vpack.c.b16 %v1128, %v1127
        %v1136 = vpack.c.b16 %v1130, %v1129
        %v1137 = vpack.c.b16 %v1132, %v1131
        %v1138 = vpack.c.b16 %v1134, %v1133
        %v1140 = vsel %vm751, %v1135, 0
        %v1143 = vsel %vm751, %v1136, 0
        %v1146 = vsel %vm751, %v1137, 0
        %v1149 = vsel %vm751, %v1138, 0
        %v1152 = vsel %vm764, %v1126, 0
        %1154 = vmatprep.subr.bf16.mxu0 0
        %1155 = vmatpush1.bf16.msra.mxu0 %v1152
        %1156 = vmatprep.subr.bf16.mxu0 0
        %1157 = vmatpush1.bf16.msra.mxu0 0
        %1158 = vmatprep.subr.bf16.mxu0 0
        %1159 = vmatpush1.bf16.msra.mxu0 0
        %1160 = vmatprep.subr.bf16.mxu0 0
        %1161 = vmatpush1.bf16.msra.mxu0 0
        %1162 = vmatprep.subr.bf16.mxu0 0
        %1163 = vmatpush1.bf16.msra.mxu0 0
        %1164 = vmatprep.subr.bf16.mxu0 0
        %1165 = vmatpush1.bf16.msra.mxu0 0
        %1166 = vmatprep.subr.bf16.mxu0 0
        %1167 = vmatpush1.bf16.msra.mxu0 0
        %1168 = vmatprep.subr.bf16.mxu0 0
        %1169 = vmatpush1.bf16.msra.mxu0 0
        %1170 = vmatprep.subr.bf16.mxu0 0
        %1171 = vmatpush1.bf16.msra.mxu0 0
        %1172 = vmatprep.subr.bf16.mxu0 0
        %1173 = vmatpush1.bf16.msra.mxu0 0
        %1174 = vmatprep.subr.bf16.mxu0 0
        %1175 = vmatpush1.bf16.msra.mxu0 0
        %1176 = vmatprep.subr.bf16.mxu0 0
        %1177 = vmatpush1.bf16.msra.mxu0 0
        %1178 = vmatprep.subr.bf16.mxu0 0
        %1179 = vmatpush1.bf16.msra.mxu0 0
        %1180 = vmatprep.subr.bf16.mxu0 0
        %1181 = vmatpush1.bf16.msra.mxu0 0
        %1182 = vmatprep.subr.bf16.mxu0 0
        %1183 = vmatpush1.bf16.msra.mxu0 0
        %1184 = vmatprep.subr.bf16.mxu0 0
        %1185 = vmatpush1.bf16.msra.mxu0 0
        %1186 = vmatprep.mubr.bf16.mxu0 0
        %1187 = vmatmul.mubr.bf16.gmra.mrb[0].mxu0 %v1140
        %v1188 = vpop.f32.mrb[0].mxu0
        %v1189 = vadd.f32 0.0, %v1188
        %v1190 = vpop.f32.mrb[0].mxu0
        %v1191 = vpop.f32.mrb[0].mxu0
        %v1192 = vadd.f32 0.0, %v1191
        %v1193 = vpop.f32.mrb[0].mxu0
        %1194 = vmatprep.mubr.bf16.mxu0 0
        %1195 = vmatmul.mubr.bf16.gmra.mrb[0].mxu0 %v1143
        %v1196 = vpop.f32.mrb[0].mxu0
        %v1197 = vadd.f32 0.0, %v1196
        %v1198 = vpop.f32.mrb[0].mxu0
        %v1199 = vpop.f32.mrb[0].mxu0
        %v1200 = vadd.f32 0.0, %v1199
        %v1201 = vpop.f32.mrb[0].mxu0
        %1202 = vmatprep.mubr.bf16.mxu0 0
        %1203 = vmatmul.mubr.bf16.gmra.mrb[0].mxu0 %v1146
        %v1204 = vpop.f32.mrb[0].mxu0
        %v1205 = vadd.f32 0.0, %v1204
        %v1206 = vpop.f32.mrb[0].mxu0
        %v1207 = vpop.f32.mrb[0].mxu0
        %v1208 = vadd.f32 0.0, %v1207
        %v1209 = vpop.f32.mrb[0].mxu0
        %1210 = vmatprep.mubr.bf16.mxu0 0
        %1211 = vmatmul.mubr.bf16.gmra.mrb[0].mxu0 %v1149
        %v1212 = vpop.f32.mrb[0].mxu0
        %v1213 = vadd.f32 0.0, %v1212
        %v1214 = vpop.f32.mrb[0].mxu0
        %v1215 = vpop.f32.mrb[0].mxu0
        %v1216 = vadd.f32 0.0, %v1215
        %v1217 = vpop.f32.mrb[0].mxu0
        %1218 = vdwg.mxu0
        %v1219 = vld [vmem:[#allocation2] sm:$0xff]
        %v1220 = vld [vmem:[#allocation2 + $0x8] sm:$0xff]
        %v1221 = vld [vmem:[#allocation2 + $0x10] sm:$0xff]
        %v1222 = vld [vmem:[#allocation2 + $0x18] sm:$0xff]
        %v1223 = vld [vmem:[#allocation2 + $0x20] sm:$0xff]
        %v1224 = vld [vmem:[#allocation2 + $0x28] sm:$0xff]
        %v1225 = vld [vmem:[#allocation2 + $0x30] sm:$0xff]
        %v1226 = vld [vmem:[#allocation2 + $0x38] sm:$0xff]
        %v1227 = vadd.f32 %v1219, %v1189
        %v1228 = vadd.f32 %v1220, %v1192
        %v1229 = vadd.f32 %v1221, %v1197
        %v1230 = vadd.f32 %v1222, %v1200
        %v1231 = vadd.f32 %v1223, %v1205
        %v1232 = vadd.f32 %v1224, %v1208
        %v1233 = vadd.f32 %v1225, %v1213
        %v1234 = vadd.f32 %v1226, %v1216
        %1235 = vst [vmem:[#allocation2] sm:$0xff] %v1227
        %1236 = vst [vmem:[#allocation2 + $0x8] sm:$0xff] %v1228
        %1237 = vst [vmem:[#allocation2 + $0x10] sm:$0xff] %v1229
        %1238 = vst [vmem:[#allocation2 + $0x18] sm:$0xff] %v1230
        %1239 = vst [vmem:[#allocation2 + $0x20] sm:$0xff] %v1231
        %1240 = vst [vmem:[#allocation2 + $0x28] sm:$0xff] %v1232
        %1241 = vst [vmem:[#allocation2 + $0x30] sm:$0xff] %v1233
        %1242 = vst [vmem:[#allocation2 + $0x38] sm:$0xff] %v1234
        %s1243 = sadd.s32 %s185, 1
        %s1244 = smul.u32 %s1243, 3
        %s1245 = smul.addr %s1244, 4
        %s1246 = scalar_lea.vmem [#allocation3], %s1245
        %v1247 = vld [vmem:[%s1246] sm:$0xf]
        %v1248 = vld [vmem:[%s1246 + $0x4] sm:$0xf]
        %v1249 = vld [vmem:[%s1246 + $0xc] sm:$0xf]
        %v1250 = vld [vmem:[%s1246 + $0x10] sm:$0xf]
        %v1251 = vld [vmem:[%s1246 + $0x18] sm:$0xf]
        %v1252 = vld [vmem:[%s1246 + $0x1c] sm:$0xf]
        %v1253 = vld [vmem:[%s1246 + $0x24] sm:$0xf]
        %v1254 = vld [vmem:[%s1246 + $0x28] sm:$0xf]
        %s1255 = scalar_lea.vmem %s1, 6
        %v1256 = vld [vmem:[%s1255] sm:$0x3]
        %v1265 = vunpack.c.l.b16 %v1247
        %v1266 = vunpack.c.l.b16 %v1248
        %v1267 = vunpack.c.l.b16 %v1249
        %v1268 = vunpack.c.l.b16 %v1250
        %v1269 = vunpack.c.l.b16 %v1251
        %v1270 = vunpack.c.l.b16 %v1252
        %v1271 = vunpack.c.l.b16 %v1253
        %v1272 = vunpack.c.l.b16 %v1254
        %v1273 = vpack.c.b16 %v1266, %v1265
        %v1274 = vpack.c.b16 %v1268, %v1267
        %v1275 = vpack.c.b16 %v1270, %v1269
        %v1276 = vpack.c.b16 %v1272, %v1271
        %v1278 = vsel %vm751, %v1273, 0
        %v1281 = vsel %vm751, %v1274, 0
        %v1284 = vsel %vm751, %v1275, 0
        %v1287 = vsel %vm751, %v1276, 0
        %v1290 = vsel %vm764, %v1256, 0
        %1292 = vmatprep.subr.bf16.mxu0 0
        %1293 = vmatpush1.bf16.msra.mxu0 %v1290
        %1294 = vmatprep.subr.bf16.mxu0 0
        %1295 = vmatpush1.bf16.msra.mxu0 0
        %1296 = vmatprep.subr.bf16.mxu0 0
        %1297 = vmatpush1.bf16.msra.mxu0 0
        %1298 = vmatprep.subr.bf16.mxu0 0
        %1299 = vmatpush1.bf16.msra.mxu0 0
        %1300 = vmatprep.subr.bf16.mxu0 0
        %1301 = vmatpush1.bf16.msra.mxu0 0
        %1302 = vmatprep.subr.bf16.mxu0 0
        %1303 = vmatpush1.bf16.msra.mxu0 0
        %1304 = vmatprep.subr.bf16.mxu0 0
        %1305 = vmatpush1.bf16.msra.mxu0 0
        %1306 = vmatprep.subr.bf16.mxu0 0
        %1307 = vmatpush1.bf16.msra.mxu0 0
        %1308 = vmatprep.subr.bf16.mxu0 0
        %1309 = vmatpush1.bf16.msra.mxu0 0
        %1310 = vmatprep.subr.bf16.mxu0 0
        %1311 = vmatpush1.bf16.msra.mxu0 0
        %1312 = vmatprep.subr.bf16.mxu0 0
        %1313 = vmatpush1.bf16.msra.mxu0 0
        %1314 = vmatprep.subr.bf16.mxu0 0
        %1315 = vmatpush1.bf16.msra.mxu0 0
        %1316 = vmatprep.subr.bf16.mxu0 0
        %1317 = vmatpush1.bf16.msra.mxu0 0
        %1318 = vmatprep.subr.bf16.mxu0 0
        %1319 = vmatpush1.bf16.msra.mxu0 0
        %1320 = vmatprep.subr.bf16.mxu0 0
        %1321 = vmatpush1.bf16.msra.mxu0 0
        %1322 = vmatprep.subr.bf16.mxu0 0
        %1323 = vmatpush1.bf16.msra.mxu0 0
        %1324 = vmatprep.mubr.bf16.mxu0 0
        %1325 = vmatmul.mubr.bf16.gmra.mrb[0].mxu0 %v1278
        %v1326 = vpop.f32.mrb[0].mxu0
        %v1327 = vadd.f32 0.0, %v1326
        %v1328 = vpop.f32.mrb[0].mxu0
        %v1329 = vpop.f32.mrb[0].mxu0
        %v1330 = vadd.f32 0.0, %v1329
        %v1331 = vpop.f32.mrb[0].mxu0
        %1332 = vmatprep.mubr.bf16.mxu0 0
        %1333 = vmatmul.mubr.bf16.gmra.mrb[0].mxu0 %v1281
        %v1334 = vpop.f32.mrb[0].mxu0
        %v1335 = vadd.f32 0.0, %v1334
        %v1336 = vpop.f32.mrb[0].mxu0
        %v1337 = vpop.f32.mrb[0].mxu0
        %v1338 = vadd.f32 0.0, %v1337
        %v1339 = vpop.f32.mrb[0].mxu0
        %1340 = vmatprep.mubr.bf16.mxu0 0
        %1341 = vmatmul.mubr.bf16.gmra.mrb[0].mxu0 %v1284
        %v1342 = vpop.f32.mrb[0].mxu0
        %v1343 = vadd.f32 0.0, %v1342
        %v1344 = vpop.f32.mrb[0].mxu0
        %v1345 = vpop.f32.mrb[0].mxu0
        %v1346 = vadd.f32 0.0, %v1345
        %v1347 = vpop.f32.mrb[0].mxu0
        %1348 = vmatprep.mubr.bf16.mxu0 0
        %1349 = vmatmul.mubr.bf16.gmra.mrb[0].mxu0 %v1287
        %v1350 = vpop.f32.mrb[0].mxu0
        %v1351 = vadd.f32 0.0, %v1350
        %v1352 = vpop.f32.mrb[0].mxu0
        %v1353 = vpop.f32.mrb[0].mxu0
        %v1354 = vadd.f32 0.0, %v1353
        %v1355 = vpop.f32.mrb[0].mxu0
        %1356 = vdwg.mxu0
        %v1357 = vld [vmem:[#allocation2] sm:$0xff]
        %v1358 = vld [vmem:[#allocation2 + $0x8] sm:$0xff]
        %v1359 = vld [vmem:[#allocation2 + $0x10] sm:$0xff]
        %v1360 = vld [vmem:[#allocation2 + $0x18] sm:$0xff]
        %v1361 = vld [vmem:[#allocation2 + $0x20] sm:$0xff]
        %v1362 = vld [vmem:[#allocation2 + $0x28] sm:$0xff]
        %v1363 = vld [vmem:[#allocation2 + $0x30] sm:$0xff]
        %v1364 = vld [vmem:[#allocation2 + $0x38] sm:$0xff]
        %v1365 = vadd.f32 %v1357, %v1327
        %v1366 = vadd.f32 %v1358, %v1330
        %v1367 = vadd.f32 %v1359, %v1335
        %v1368 = vadd.f32 %v1360, %v1338
        %v1369 = vadd.f32 %v1361, %v1343
        %v1370 = vadd.f32 %v1362, %v1346
        %v1371 = vadd.f32 %v1363, %v1351
        %v1372 = vadd.f32 %v1364, %v1354
        %1373 = vst [vmem:[#allocation2] sm:$0xff] %v1365
        %1374 = vst [vmem:[#allocation2 + $0x8] sm:$0xff] %v1366
        %1375 = vst [vmem:[#allocation2 + $0x10] sm:$0xff] %v1367
        %1376 = vst [vmem:[#allocation2 + $0x18] sm:$0xff] %v1368
        %1377 = vst [vmem:[#allocation2 + $0x20] sm:$0xff] %v1369
        %1378 = vst [vmem:[#allocation2 + $0x28] sm:$0xff] %v1370
        %1379 = vst [vmem:[#allocation2 + $0x30] sm:$0xff] %v1371
        %1380 = vst [vmem:[#allocation2 + $0x38] sm:$0xff] %v1372
        %v1381 = vld [vmem:[%s1246] sm:$0xf]
        %v1382 = vld [vmem:[%s1246 + $0x4] sm:$0xf]
        %v1383 = vld [vmem:[%s1246 + $0x8] sm:$0x1]
        %v1384 = vld [vmem:[%s1246 + $0xc] sm:$0xf]
        %v1385 = vld [vmem:[%s1246 + $0x10] sm:$0xf]
        %v1386 = vld [vmem:[%s1246 + $0x14] sm:$0x1]
        %v1387 = vld [vmem:[%s1246 + $0x18] sm:$0xf]
        %v1388 = vld [vmem:[%s1246 + $0x1c] sm:$0xf]
        %v1389 = vld [vmem:[%s1246 + $0x20] sm:$0x1]
        %v1390 = vld [vmem:[%s1246 + $0x24] sm:$0xf]
        %v1391 = vld [vmem:[%s1246 + $0x28] sm:$0xf]
        %v1392 = vld [vmem:[%s1246 + $0x2c] sm:$0x1]
        %v1394 = vshrl.u32 %v1381, 16
        %v1396 = vrot.slane %v1394, 4
        %v1397 = vshll.u32 %v1381, 16
        %v1399 = vrot.slane %v1397, 5
        %v1400 = vor.u32 %v1396, %v1399
        %v1401 = vrot.slane %v1400, 4
        %v1403 = vshll.u32 %v1382, 16
        %v1405 = vrot.slane %v1403, 5
        %v1406 = vsel %vm855, %v1401, %v1405
        %v1407 = vshrl.u32 %v1382, 16
        %v1409 = vrot.slane %v1407, 4
        %v1410 = vor.u32 %v1409, %v1405
        %v1411 = vrot.slane %v1410, 4
        %v1413 = vshll.u32 %v1383, 16
        %v1415 = vrot.slane %v1413, 5
        %v1416 = vsel %vm855, %v1411, %v1415
        %v1418 = vshrl.u32 %v1384, 16
        %v1420 = vrot.slane %v1418, 4
        %v1421 = vshll.u32 %v1384, 16
        %v1423 = vrot.slane %v1421, 5
        %v1424 = vor.u32 %v1420, %v1423
        %v1425 = vrot.slane %v1424, 4
        %v1427 = vshll.u32 %v1385, 16
        %v1429 = vrot.slane %v1427, 5
        %v1430 = vsel %vm855, %v1425, %v1429
        %v1431 = vshrl.u32 %v1385, 16
        %v1433 = vrot.slane %v1431, 4
        %v1434 = vor.u32 %v1433, %v1429
        %v1435 = vrot.slane %v1434, 4
        %v1437 = vshll.u32 %v1386, 16
        %v1439 = vrot.slane %v1437, 5
        %v1440 = vsel %vm855, %v1435, %v1439
        %v1442 = vshrl.u32 %v1387, 16
        %v1444 = vrot.slane %v1442, 4
        %v1445 = vshll.u32 %v1387, 16
        %v1447 = vrot.slane %v1445, 5
        %v1448 = vor.u32 %v1444, %v1447
        %v1449 = vrot.slane %v1448, 4
        %v1451 = vshll.u32 %v1388, 16
        %v1453 = vrot.slane %v1451, 5
        %v1454 = vsel %vm855, %v1449, %v1453
        %v1455 = vshrl.u32 %v1388, 16
        %v1457 = vrot.slane %v1455, 4
        %v1458 = vor.u32 %v1457, %v1453
        %v1459 = vrot.slane %v1458, 4
        %v1461 = vshll.u32 %v1389, 16
        %v1463 = vrot.slane %v1461, 5
        %v1464 = vsel %vm855, %v1459, %v1463
        %v1466 = vshrl.u32 %v1390, 16
        %v1468 = vrot.slane %v1466, 4
        %v1469 = vshll.u32 %v1390, 16
        %v1471 = vrot.slane %v1469, 5
        %v1472 = vor.u32 %v1468, %v1471
        %v1473 = vrot.slane %v1472, 4
        %v1475 = vshll.u32 %v1391, 16
        %v1477 = vrot.slane %v1475, 5
        %v1478 = vsel %vm855, %v1473, %v1477
        %v1479 = vshrl.u32 %v1391, 16
        %v1481 = vrot.slane %v1479, 4
        %v1482 = vor.u32 %v1481, %v1477
        %v1483 = vrot.slane %v1482, 4
        %v1485 = vshll.u32 %v1392, 16
        %v1487 = vrot.slane %v1485, 5
        %v1488 = vsel %vm855, %v1483, %v1487
        %s1489 = scalar_lea.vmem %s1, 8
        %v1490 = vld [vmem:[%s1489] sm:$0x3]
        %v1491 = vunpack.c.l.b16 %v1406
        %v1492 = vunpack.c.l.b16 %v1416
        %v1493 = vunpack.c.l.b16 %v1430
        %v1494 = vunpack.c.l.b16 %v1440
        %v1495 = vunpack.c.l.b16 %v1454
        %v1496 = vunpack.c.l.b16 %v1464
        %v1497 = vunpack.c.l.b16 %v1478
        %v1498 = vunpack.c.l.b16 %v1488
        %v1499 = vpack.c.b16 %v1492, %v1491
        %v1500 = vpack.c.b16 %v1494, %v1493
        %v1501 = vpack.c.b16 %v1496, %v1495
        %v1502 = vpack.c.b16 %v1498, %v1497
        %v1504 = vsel %vm751, %v1499, 0
        %v1507 = vsel %vm751, %v1500, 0
        %v1510 = vsel %vm751, %v1501, 0
        %v1513 = vsel %vm751, %v1502, 0
        %v1516 = vsel %vm764, %v1490, 0
        %1518 = vmatprep.subr.bf16.mxu0 0
        %1519 = vmatpush1.bf16.msra.mxu0 %v1516
        %1520 = vmatprep.subr.bf16.mxu0 0
        %1521 = vmatpush1.bf16.msra.mxu0 0
        %1522 = vmatprep.subr.bf16.mxu0 0
        %1523 = vmatpush1.bf16.msra.mxu0 0
        %1524 = vmatprep.subr.bf16.mxu0 0
        %1525 = vmatpush1.bf16.msra.mxu0 0
        %1526 = vmatprep.subr.bf16.mxu0 0
        %1527 = vmatpush1.bf16.msra.mxu0 0
        %1528 = vmatprep.subr.bf16.mxu0 0
        %1529 = vmatpush1.bf16.msra.mxu0 0
        %1530 = vmatprep.subr.bf16.mxu0 0
        %1531 = vmatpush1.bf16.msra.mxu0 0
        %1532 = vmatprep.subr.bf16.mxu0 0
        %1533 = vmatpush1.bf16.msra.mxu0 0
        %1534 = vmatprep.subr.bf16.mxu0 0
        %1535 = vmatpush1.bf16.msra.mxu0 0
        %1536 = vmatprep.subr.bf16.mxu0 0
        %1537 = vmatpush1.bf16.msra.mxu0 0
        %1538 = vmatprep.subr.bf16.mxu0 0
        %1539 = vmatpush1.bf16.msra.mxu0 0
        %1540 = vmatprep.subr.bf16.mxu0 0
        %1541 = vmatpush1.bf16.msra.mxu0 0
        %1542 = vmatprep.subr.bf16.mxu0 0
        %1543 = vmatpush1.bf16.msra.mxu0 0
        %1544 = vmatprep.subr.bf16.mxu0 0
        %1545 = vmatpush1.bf16.msra.mxu0 0
        %1546 = vmatprep.subr.bf16.mxu0 0
        %1547 = vmatpush1.bf16.msra.mxu0 0
        %1548 = vmatprep.subr.bf16.mxu0 0
        %1549 = vmatpush1.bf16.msra.mxu0 0
        %1550 = vmatprep.mubr.bf16.mxu0 0
        %1551 = vmatmul.mubr.bf16.gmra.mrb[0].mxu0 %v1504
        %v1552 = vpop.f32.mrb[0].mxu0
        %v1553 = vadd.f32 0.0, %v1552
        %v1554 = vpop.f32.mrb[0].mxu0
        %v1555 = vpop.f32.mrb[0].mxu0
        %v1556 = vadd.f32 0.0, %v1555
        %v1557 = vpop.f32.mrb[0].mxu0
        %1558 = vmatprep.mubr.bf16.mxu0 0
        %1559 = vmatmul.mubr.bf16.gmra.mrb[0].mxu0 %v1507
        %v1560 = vpop.f32.mrb[0].mxu0
        %v1561 = vadd.f32 0.0, %v1560
        %v1562 = vpop.f32.mrb[0].mxu0
        %v1563 = vpop.f32.mrb[0].mxu0
        %v1564 = vadd.f32 0.0, %v1563
        %v1565 = vpop.f32.mrb[0].mxu0
        %1566 = vmatprep.mubr.bf16.mxu0 0
        %1567 = vmatmul.mubr.bf16.gmra.mrb[0].mxu0 %v1510
        %v1568 = vpop.f32.mrb[0].mxu0
        %v1569 = vadd.f32 0.0, %v1568
        %v1570 = vpop.f32.mrb[0].mxu0
        %v1571 = vpop.f32.mrb[0].mxu0
        %v1572 = vadd.f32 0.0, %v1571
        %v1573 = vpop.f32.mrb[0].mxu0
        %1574 = vmatprep.mubr.bf16.mxu0 0
        %1575 = vmatmul.mubr.bf16.gmra.mrb[0].mxu0 %v1513
        %v1576 = vpop.f32.mrb[0].mxu0
        %v1577 = vadd.f32 0.0, %v1576
        %v1578 = vpop.f32.mrb[0].mxu0
        %v1579 = vpop.f32.mrb[0].mxu0
        %v1580 = vadd.f32 0.0, %v1579
        %v1581 = vpop.f32.mrb[0].mxu0
        %1582 = vdwg.mxu0
        %v1583 = vld [vmem:[#allocation2] sm:$0xff]
        %v1584 = vld [vmem:[#allocation2 + $0x8] sm:$0xff]
        %v1585 = vld [vmem:[#allocation2 + $0x10] sm:$0xff]
        %v1586 = vld [vmem:[#allocation2 + $0x18] sm:$0xff]
        %v1587 = vld [vmem:[#allocation2 + $0x20] sm:$0xff]
        %v1588 = vld [vmem:[#allocation2 + $0x28] sm:$0xff]
        %v1589 = vld [vmem:[#allocation2 + $0x30] sm:$0xff]
        %v1590 = vld [vmem:[#allocation2 + $0x38] sm:$0xff]
        %v1591 = vadd.f32 %v1583, %v1553
        %v1592 = vadd.f32 %v1584, %v1556
        %v1593 = vadd.f32 %v1585, %v1561
        %v1594 = vadd.f32 %v1586, %v1564
        %v1595 = vadd.f32 %v1587, %v1569
        %v1596 = vadd.f32 %v1588, %v1572
        %v1597 = vadd.f32 %v1589, %v1577
        %v1598 = vadd.f32 %v1590, %v1580
        %1599 = vst [vmem:[#allocation2] sm:$0xff] %v1591
        %1600 = vst [vmem:[#allocation2 + $0x8] sm:$0xff] %v1592
        %1601 = vst [vmem:[#allocation2 + $0x10] sm:$0xff] %v1593
        %1602 = vst [vmem:[#allocation2 + $0x18] sm:$0xff] %v1594
        %1603 = vst [vmem:[#allocation2 + $0x20] sm:$0xff] %v1595
        %1604 = vst [vmem:[#allocation2 + $0x28] sm:$0xff] %v1596
        %1605 = vst [vmem:[#allocation2 + $0x30] sm:$0xff] %v1597
        %1606 = vst [vmem:[#allocation2 + $0x38] sm:$0xff] %v1598
        %v1607 = vld [vmem:[%s1246] sm:$0xe]
        %v1608 = vld [vmem:[%s1246 + $0x4] sm:$0xf]
        %v1609 = vld [vmem:[%s1246 + $0x8] sm:$0x1]
        %v1610 = vld [vmem:[%s1246 + $0xc] sm:$0xe]
        %v1611 = vld [vmem:[%s1246 + $0x10] sm:$0xf]
        %v1612 = vld [vmem:[%s1246 + $0x14] sm:$0x1]
        %v1613 = vld [vmem:[%s1246 + $0x18] sm:$0xe]
        %v1614 = vld [vmem:[%s1246 + $0x1c] sm:$0xf]
        %v1615 = vld [vmem:[%s1246 + $0x20] sm:$0x1]
        %v1616 = vld [vmem:[%s1246 + $0x24] sm:$0xe]
        %v1617 = vld [vmem:[%s1246 + $0x28] sm:$0xf]
        %v1618 = vld [vmem:[%s1246 + $0x2c] sm:$0x1]
        %v1631 = vrot.slane %v1607, 5
        %v1632 = vrot.slane %v1631, 4
        %v1633 = vrot.slane %v1608, 5
        %v1634 = vsel %vm1096, %v1632, %v1633
        %v1635 = vrot.slane %v1633, 4
        %v1636 = vrot.slane %v1609, 5
        %v1637 = vsel %vm1096, %v1635, %v1636
        %v1638 = vrot.slane %v1610, 5
        %v1639 = vrot.slane %v1638, 4
        %v1640 = vrot.slane %v1611, 5
        %v1641 = vsel %vm1096, %v1639, %v1640
        %v1642 = vrot.slane %v1640, 4
        %v1643 = vrot.slane %v1612, 5
        %v1644 = vsel %vm1096, %v1642, %v1643
        %v1645 = vrot.slane %v1613, 5
        %v1646 = vrot.slane %v1645, 4
        %v1647 = vrot.slane %v1614, 5
        %v1648 = vsel %vm1096, %v1646, %v1647
        %v1649 = vrot.slane %v1647, 4
        %v1650 = vrot.slane %v1615, 5
        %v1651 = vsel %vm1096, %v1649, %v1650
        %v1652 = vrot.slane %v1616, 5
        %v1653 = vrot.slane %v1652, 4
        %v1654 = vrot.slane %v1617, 5
        %v1655 = vsel %vm1096, %v1653, %v1654
        %v1656 = vrot.slane %v1654, 4
        %v1657 = vrot.slane %v1618, 5
        %v1658 = vsel %vm1096, %v1656, %v1657
        %s1659 = scalar_lea.vmem %s1, 10
        %v1660 = vld [vmem:[%s1659] sm:$0x3]
        %v1661 = vunpack.c.l.b16 %v1634
        %v1662 = vunpack.c.l.b16 %v1637
        %v1663 = vunpack.c.l.b16 %v1641
        %v1664 = vunpack.c.l.b16 %v1644
        %v1665 = vunpack.c.l.b16 %v1648
        %v1666 = vunpack.c.l.b16 %v1651
        %v1667 = vunpack.c.l.b16 %v1655
        %v1668 = vunpack.c.l.b16 %v1658
        %v1669 = vpack.c.b16 %v1662, %v1661
        %v1670 = vpack.c.b16 %v1664, %v1663
        %v1671 = vpack.c.b16 %v1666, %v1665
        %v1672 = vpack.c.b16 %v1668, %v1667
        %v1674 = vsel %vm751, %v1669, 0
        %v1677 = vsel %vm751, %v1670, 0
        %v1680 = vsel %vm751, %v1671, 0
        %v1683 = vsel %vm751, %v1672, 0
        %v1686 = vsel %vm764, %v1660, 0
        %1688 = vmatprep.subr.bf16.mxu0 0
        %1689 = vmatpush1.bf16.msra.mxu0 %v1686
        %1690 = vmatprep.subr.bf16.mxu0 0
        %1691 = vmatpush1.bf16.msra.mxu0 0
        %1692 = vmatprep.subr.bf16.mxu0 0
        %1693 = vmatpush1.bf16.msra.mxu0 0
        %1694 = vmatprep.subr.bf16.mxu0 0
        %1695 = vmatpush1.bf16.msra.mxu0 0
        %1696 = vmatprep.subr.bf16.mxu0 0
        %1697 = vmatpush1.bf16.msra.mxu0 0
        %1698 = vmatprep.subr.bf16.mxu0 0
        %1699 = vmatpush1.bf16.msra.mxu0 0
        %1700 = vmatprep.subr.bf16.mxu0 0
        %1701 = vmatpush1.bf16.msra.mxu0 0
        %1702 = vmatprep.subr.bf16.mxu0 0
        %1703 = vmatpush1.bf16.msra.mxu0 0
        %1704 = vmatprep.subr.bf16.mxu0 0
        %1705 = vmatpush1.bf16.msra.mxu0 0
        %1706 = vmatprep.subr.bf16.mxu0 0
        %1707 = vmatpush1.bf16.msra.mxu0 0
        %1708 = vmatprep.subr.bf16.mxu0 0
        %1709 = vmatpush1.bf16.msra.mxu0 0
        %1710 = vmatprep.subr.bf16.mxu0 0
        %1711 = vmatpush1.bf16.msra.mxu0 0
        %1712 = vmatprep.subr.bf16.mxu0 0
        %1713 = vmatpush1.bf16.msra.mxu0 0
        %1714 = vmatprep.subr.bf16.mxu0 0
        %1715 = vmatpush1.bf16.msra.mxu0 0
        %1716 = vmatprep.subr.bf16.mxu0 0
        %1717 = vmatpush1.bf16.msra.mxu0 0
        %1718 = vmatprep.subr.bf16.mxu0 0
        %1719 = vmatpush1.bf16.msra.mxu0 0
        %1720 = vmatprep.mubr.bf16.mxu0 0
        %1721 = vmatmul.mubr.bf16.gmra.mrb[0].mxu0 %v1674
        %v1722 = vpop.f32.mrb[0].mxu0
        %v1723 = vadd.f32 0.0, %v1722
        %v1724 = vpop.f32.mrb[0].mxu0
        %v1725 = vpop.f32.mrb[0].mxu0
        %v1726 = vadd.f32 0.0, %v1725
        %v1727 = vpop.f32.mrb[0].mxu0
        %1728 = vmatprep.mubr.bf16.mxu0 0
        %1729 = vmatmul.mubr.bf16.gmra.mrb[0].mxu0 %v1677
        %v1730 = vpop.f32.mrb[0].mxu0
        %v1731 = vadd.f32 0.0, %v1730
        %v1732 = vpop.f32.mrb[0].mxu0
        %v1733 = vpop.f32.mrb[0].mxu0
        %v1734 = vadd.f32 0.0, %v1733
        %v1735 = vpop.f32.mrb[0].mxu0
        %1736 = vmatprep.mubr.bf16.mxu0 0
        %1737 = vmatmul.mubr.bf16.gmra.mrb[0].mxu0 %v1680
        %v1738 = vpop.f32.mrb[0].mxu0
        %v1739 = vadd.f32 0.0, %v1738
        %v1740 = vpop.f32.mrb[0].mxu0
        %v1741 = vpop.f32.mrb[0].mxu0
        %v1742 = vadd.f32 0.0, %v1741
        %v1743 = vpop.f32.mrb[0].mxu0
        %1744 = vmatprep.mubr.bf16.mxu0 0
        %1745 = vmatmul.mubr.bf16.gmra.mrb[0].mxu0 %v1683
        %v1746 = vpop.f32.mrb[0].mxu0
        %v1747 = vadd.f32 0.0, %v1746
        %v1748 = vpop.f32.mrb[0].mxu0
        %v1749 = vpop.f32.mrb[0].mxu0
        %v1750 = vadd.f32 0.0, %v1749
        %v1751 = vpop.f32.mrb[0].mxu0
        %1752 = vdwg.mxu0
        %v1753 = vld [vmem:[#allocation2] sm:$0xff]
        %v1754 = vld [vmem:[#allocation2 + $0x8] sm:$0xff]
        %v1755 = vld [vmem:[#allocation2 + $0x10] sm:$0xff]
        %v1756 = vld [vmem:[#allocation2 + $0x18] sm:$0xff]
        %v1757 = vld [vmem:[#allocation2 + $0x20] sm:$0xff]
        %v1758 = vld [vmem:[#allocation2 + $0x28] sm:$0xff]
        %v1759 = vld [vmem:[#allocation2 + $0x30] sm:$0xff]
        %v1760 = vld [vmem:[#allocation2 + $0x38] sm:$0xff]
        %v1761 = vadd.f32 %v1753, %v1723
        %v1762 = vadd.f32 %v1754, %v1726
        %v1763 = vadd.f32 %v1755, %v1731
        %v1764 = vadd.f32 %v1756, %v1734
        %v1765 = vadd.f32 %v1757, %v1739
        %v1766 = vadd.f32 %v1758, %v1742
        %v1767 = vadd.f32 %v1759, %v1747
        %v1768 = vadd.f32 %v1760, %v1750
        %1769 = vst [vmem:[#allocation2] sm:$0xff] %v1761
        %1770 = vst [vmem:[#allocation2 + $0x8] sm:$0xff] %v1762
        %1771 = vst [vmem:[#allocation2 + $0x10] sm:$0xff] %v1763
        %1772 = vst [vmem:[#allocation2 + $0x18] sm:$0xff] %v1764
        %1773 = vst [vmem:[#allocation2 + $0x20] sm:$0xff] %v1765
        %1774 = vst [vmem:[#allocation2 + $0x28] sm:$0xff] %v1766
        %1775 = vst [vmem:[#allocation2 + $0x30] sm:$0xff] %v1767
        %1776 = vst [vmem:[#allocation2 + $0x38] sm:$0xff] %v1768
        %s1777 = sadd.s32 %s185, 2
        %s1778 = smul.u32 %s1777, 3
        %s1779 = smul.addr %s1778, 4
        %s1780 = scalar_lea.vmem [#allocation3], %s1779
        %v1781 = vld [vmem:[%s1780] sm:$0xf]
        %v1782 = vld [vmem:[%s1780 + $0x4] sm:$0xf]
        %v1783 = vld [vmem:[%s1780 + $0xc] sm:$0xf]
        %v1784 = vld [vmem:[%s1780 + $0x10] sm:$0xf]
        %v1785 = vld [vmem:[%s1780 + $0x18] sm:$0xf]
        %v1786 = vld [vmem:[%s1780 + $0x1c] sm:$0xf]
        %v1787 = vld [vmem:[%s1780 + $0x24] sm:$0xf]
        %v1788 = vld [vmem:[%s1780 + $0x28] sm:$0xf]
        %s1789 = scalar_lea.vmem %s1, 12
        %v1790 = vld [vmem:[%s1789] sm:$0x3]
        %v1799 = vunpack.c.l.b16 %v1781
        %v1800 = vunpack.c.l.b16 %v1782
        %v1801 = vunpack.c.l.b16 %v1783
        %v1802 = vunpack.c.l.b16 %v1784
        %v1803 = vunpack.c.l.b16 %v1785
        %v1804 = vunpack.c.l.b16 %v1786
        %v1805 = vunpack.c.l.b16 %v1787
        %v1806 = vunpack.c.l.b16 %v1788
        %v1807 = vpack.c.b16 %v1800, %v1799
        %v1808 = vpack.c.b16 %v1802, %v1801
        %v1809 = vpack.c.b16 %v1804, %v1803
        %v1810 = vpack.c.b16 %v1806, %v1805
        %v1812 = vsel %vm751, %v1807, 0
        %v1815 = vsel %vm751, %v1808, 0
        %v1818 = vsel %vm751, %v1809, 0
        %v1821 = vsel %vm751, %v1810, 0
        %v1824 = vsel %vm764, %v1790, 0
        %1826 = vmatprep.subr.bf16.mxu0 0
        %1827 = vmatpush1.bf16.msra.mxu0 %v1824
        %1828 = vmatprep.subr.bf16.mxu0 0
        %1829 = vmatpush1.bf16.msra.mxu0 0
        %1830 = vmatprep.subr.bf16.mxu0 0
        %1831 = vmatpush1.bf16.msra.mxu0 0
        %1832 = vmatprep.subr.bf16.mxu0 0
        %1833 = vmatpush1.bf16.msra.mxu0 0
        %1834 = vmatprep.subr.bf16.mxu0 0
        %1835 = vmatpush1.bf16.msra.mxu0 0
        %1836 = vmatprep.subr.bf16.mxu0 0
        %1837 = vmatpush1.bf16.msra.mxu0 0
        %1838 = vmatprep.subr.bf16.mxu0 0
        %1839 = vmatpush1.bf16.msra.mxu0 0
        %1840 = vmatprep.subr.bf16.mxu0 0
        %1841 = vmatpush1.bf16.msra.mxu0 0
        %1842 = vmatprep.subr.bf16.mxu0 0
        %1843 = vmatpush1.bf16.msra.mxu0 0
        %1844 = vmatprep.subr.bf16.mxu0 0
        %1845 = vmatpush1.bf16.msra.mxu0 0
        %1846 = vmatprep.subr.bf16.mxu0 0
        %1847 = vmatpush1.bf16.msra.mxu0 0
        %1848 = vmatprep.subr.bf16.mxu0 0
        %1849 = vmatpush1.bf16.msra.mxu0 0
        %1850 = vmatprep.subr.bf16.mxu0 0
        %1851 = vmatpush1.bf16.msra.mxu0 0
        %1852 = vmatprep.subr.bf16.mxu0 0
        %1853 = vmatpush1.bf16.msra.mxu0 0
        %1854 = vmatprep.subr.bf16.mxu0 0
        %1855 = vmatpush1.bf16.msra.mxu0 0
        %1856 = vmatprep.subr.bf16.mxu0 0
        %1857 = vmatpush1.bf16.msra.mxu0 0
        %1858 = vmatprep.mubr.bf16.mxu0 0
        %1859 = vmatmul.mubr.bf16.gmra.mrb[0].mxu0 %v1812
        %v1860 = vpop.f32.mrb[0].mxu0
        %v1861 = vadd.f32 0.0, %v1860
        %v1862 = vpop.f32.mrb[0].mxu0
        %v1863 = vpop.f32.mrb[0].mxu0
        %v1864 = vadd.f32 0.0, %v1863
        %v1865 = vpop.f32.mrb[0].mxu0
        %1866 = vmatprep.mubr.bf16.mxu0 0
        %1867 = vmatmul.mubr.bf16.gmra.mrb[0].mxu0 %v1815
        %v1868 = vpop.f32.mrb[0].mxu0
        %v1869 = vadd.f32 0.0, %v1868
        %v1870 = vpop.f32.mrb[0].mxu0
        %v1871 = vpop.f32.mrb[0].mxu0
        %v1872 = vadd.f32 0.0, %v1871
        %v1873 = vpop.f32.mrb[0].mxu0
        %1874 = vmatprep.mubr.bf16.mxu0 0
        %1875 = vmatmul.mubr.bf16.gmra.mrb[0].mxu0 %v1818
        %v1876 = vpop.f32.mrb[0].mxu0
        %v1877 = vadd.f32 0.0, %v1876
        %v1878 = vpop.f32.mrb[0].mxu0
        %v1879 = vpop.f32.mrb[0].mxu0
        %v1880 = vadd.f32 0.0, %v1879
        %v1881 = vpop.f32.mrb[0].mxu0
        %1882 = vmatprep.mubr.bf16.mxu0 0
        %1883 = vmatmul.mubr.bf16.gmra.mrb[0].mxu0 %v1821
        %v1884 = vpop.f32.mrb[0].mxu0
        %v1885 = vadd.f32 0.0, %v1884
        %v1886 = vpop.f32.mrb[0].mxu0
        %v1887 = vpop.f32.mrb[0].mxu0
        %v1888 = vadd.f32 0.0, %v1887
        %v1889 = vpop.f32.mrb[0].mxu0
        %1890 = vdwg.mxu0
        %v1891 = vld [vmem:[#allocation2] sm:$0xff]
        %v1892 = vld [vmem:[#allocation2 + $0x8] sm:$0xff]
        %v1893 = vld [vmem:[#allocation2 + $0x10] sm:$0xff]
        %v1894 = vld [vmem:[#allocation2 + $0x18] sm:$0xff]
        %v1895 = vld [vmem:[#allocation2 + $0x20] sm:$0xff]
        %v1896 = vld [vmem:[#allocation2 + $0x28] sm:$0xff]
        %v1897 = vld [vmem:[#allocation2 + $0x30] sm:$0xff]
        %v1898 = vld [vmem:[#allocation2 + $0x38] sm:$0xff]
        %v1899 = vadd.f32 %v1891, %v1861
        %v1900 = vadd.f32 %v1892, %v1864
        %v1901 = vadd.f32 %v1893, %v1869
        %v1902 = vadd.f32 %v1894, %v1872
        %v1903 = vadd.f32 %v1895, %v1877
        %v1904 = vadd.f32 %v1896, %v1880
        %v1905 = vadd.f32 %v1897, %v1885
        %v1906 = vadd.f32 %v1898, %v1888
        %1907 = vst [vmem:[#allocation2] sm:$0xff] %v1899
        %1908 = vst [vmem:[#allocation2 + $0x8] sm:$0xff] %v1900
        %1909 = vst [vmem:[#allocation2 + $0x10] sm:$0xff] %v1901
        %1910 = vst [vmem:[#allocation2 + $0x18] sm:$0xff] %v1902
        %1911 = vst [vmem:[#allocation2 + $0x20] sm:$0xff] %v1903
        %1912 = vst [vmem:[#allocation2 + $0x28] sm:$0xff] %v1904
        %1913 = vst [vmem:[#allocation2 + $0x30] sm:$0xff] %v1905
        %1914 = vst [vmem:[#allocation2 + $0x38] sm:$0xff] %v1906
        %v1915 = vld [vmem:[%s1780] sm:$0xf]
        %v1916 = vld [vmem:[%s1780 + $0x4] sm:$0xf]
        %v1917 = vld [vmem:[%s1780 + $0x8] sm:$0x1]
        %v1918 = vld [vmem:[%s1780 + $0xc] sm:$0xf]
        %v1919 = vld [vmem:[%s1780 + $0x10] sm:$0xf]
        %v1920 = vld [vmem:[%s1780 + $0x14] sm:$0x1]
        %v1921 = vld [vmem:[%s1780 + $0x18] sm:$0xf]
        %v1922 = vld [vmem:[%s1780 + $0x1c] sm:$0xf]
        %v1923 = vld [vmem:[%s1780 + $0x20] sm:$0x1]
        %v1924 = vld [vmem:[%s1780 + $0x24] sm:$0xf]
        %v1925 = vld [vmem:[%s1780 + $0x28] sm:$0xf]
        %v1926 = vld [vmem:[%s1780 + $0x2c] sm:$0x1]
        %v1928 = vshrl.u32 %v1915, 16
        %v1930 = vrot.slane %v1928, 4
        %v1931 = vshll.u32 %v1915, 16
        %v1933 = vrot.slane %v1931, 5
        %v1934 = vor.u32 %v1930, %v1933
        %v1935 = vrot.slane %v1934, 4
        %v1937 = vshll.u32 %v1916, 16
        %v1939 = vrot.slane %v1937, 5
        %v1940 = vsel %vm855, %v1935, %v1939
        %v1941 = vshrl.u32 %v1916, 16
        %v1943 = vrot.slane %v1941, 4
        %v1944 = vor.u32 %v1943, %v1939
        %v1945 = vrot.slane %v1944, 4
        %v1947 = vshll.u32 %v1917, 16
        %v1949 = vrot.slane %v1947, 5
        %v1950 = vsel %vm855, %v1945, %v1949
        %v1952 = vshrl.u32 %v1918, 16
        %v1954 = vrot.slane %v1952, 4
        %v1955 = vshll.u32 %v1918, 16
        %v1957 = vrot.slane %v1955, 5
        %v1958 = vor.u32 %v1954, %v1957
        %v1959 = vrot.slane %v1958, 4
        %v1961 = vshll.u32 %v1919, 16
        %v1963 = vrot.slane %v1961, 5
        %v1964 = vsel %vm855, %v1959, %v1963
        %v1965 = vshrl.u32 %v1919, 16
        %v1967 = vrot.slane %v1965, 4
        %v1968 = vor.u32 %v1967, %v1963
        %v1969 = vrot.slane %v1968, 4
        %v1971 = vshll.u32 %v1920, 16
        %v1973 = vrot.slane %v1971, 5
        %v1974 = vsel %vm855, %v1969, %v1973
        %v1976 = vshrl.u32 %v1921, 16
        %v1978 = vrot.slane %v1976, 4
        %v1979 = vshll.u32 %v1921, 16
        %v1981 = vrot.slane %v1979, 5
        %v1982 = vor.u32 %v1978, %v1981
        %v1983 = vrot.slane %v1982, 4
        %v1985 = vshll.u32 %v1922, 16
        %v1987 = vrot.slane %v1985, 5
        %v1988 = vsel %vm855, %v1983, %v1987
        %v1989 = vshrl.u32 %v1922, 16
        %v1991 = vrot.slane %v1989, 4
        %v1992 = vor.u32 %v1991, %v1987
        %v1993 = vrot.slane %v1992, 4
        %v1995 = vshll.u32 %v1923, 16
        %v1997 = vrot.slane %v1995, 5
        %v1998 = vsel %vm855, %v1993, %v1997
        %v2000 = vshrl.u32 %v1924, 16
        %v2002 = vrot.slane %v2000, 4
        %v2003 = vshll.u32 %v1924, 16
        %v2005 = vrot.slane %v2003, 5
        %v2006 = vor.u32 %v2002, %v2005
        %v2007 = vrot.slane %v2006, 4
        %v2009 = vshll.u32 %v1925, 16
        %v2011 = vrot.slane %v2009, 5
        %v2012 = vsel %vm855, %v2007, %v2011
        %v2013 = vshrl.u32 %v1925, 16
        %v2015 = vrot.slane %v2013, 4
        %v2016 = vor.u32 %v2015, %v2011
        %v2017 = vrot.slane %v2016, 4
        %v2019 = vshll.u32 %v1926, 16
        %v2021 = vrot.slane %v2019, 5
        %v2022 = vsel %vm855, %v2017, %v2021
        %s2023 = scalar_lea.vmem %s1, 14
        %v2024 = vld [vmem:[%s2023] sm:$0x3]
        %v2025 = vunpack.c.l.b16 %v1940
        %v2026 = vunpack.c.l.b16 %v1950
        %v2027 = vunpack.c.l.b16 %v1964
        %v2028 = vunpack.c.l.b16 %v1974
        %v2029 = vunpack.c.l.b16 %v1988
        %v2030 = vunpack.c.l.b16 %v1998
        %v2031 = vunpack.c.l.b16 %v2012
        %v2032 = vunpack.c.l.b16 %v2022
        %v2033 = vpack.c.b16 %v2026, %v2025
        %v2034 = vpack.c.b16 %v2028, %v2027
        %v2035 = vpack.c.b16 %v2030, %v2029
        %v2036 = vpack.c.b16 %v2032, %v2031
        %v2038 = vsel %vm751, %v2033, 0
        %v2041 = vsel %vm751, %v2034, 0
        %v2044 = vsel %vm751, %v2035, 0
        %v2047 = vsel %vm751, %v2036, 0
        %v2050 = vsel %vm764, %v2024, 0
        %2052 = vmatprep.subr.bf16.mxu0 0
        %2053 = vmatpush1.bf16.msra.mxu0 %v2050
        %2054 = vmatprep.subr.bf16.mxu0 0
        %2055 = vmatpush1.bf16.msra.mxu0 0
        %2056 = vmatprep.subr.bf16.mxu0 0
        %2057 = vmatpush1.bf16.msra.mxu0 0
        %2058 = vmatprep.subr.bf16.mxu0 0
        %2059 = vmatpush1.bf16.msra.mxu0 0
        %2060 = vmatprep.subr.bf16.mxu0 0
        %2061 = vmatpush1.bf16.msra.mxu0 0
        %2062 = vmatprep.subr.bf16.mxu0 0
        %2063 = vmatpush1.bf16.msra.mxu0 0
        %2064 = vmatprep.subr.bf16.mxu0 0
        %2065 = vmatpush1.bf16.msra.mxu0 0
        %2066 = vmatprep.subr.bf16.mxu0 0
        %2067 = vmatpush1.bf16.msra.mxu0 0
        %2068 = vmatprep.subr.bf16.mxu0 0
        %2069 = vmatpush1.bf16.msra.mxu0 0
        %2070 = vmatprep.subr.bf16.mxu0 0
        %2071 = vmatpush1.bf16.msra.mxu0 0
        %2072 = vmatprep.subr.bf16.mxu0 0
        %2073 = vmatpush1.bf16.msra.mxu0 0
        %2074 = vmatprep.subr.bf16.mxu0 0
        %2075 = vmatpush1.bf16.msra.mxu0 0
        %2076 = vmatprep.subr.bf16.mxu0 0
        %2077 = vmatpush1.bf16.msra.mxu0 0
        %2078 = vmatprep.subr.bf16.mxu0 0
        %2079 = vmatpush1.bf16.msra.mxu0 0
        %2080 = vmatprep.subr.bf16.mxu0 0
        %2081 = vmatpush1.bf16.msra.mxu0 0
        %2082 = vmatprep.subr.bf16.mxu0 0
        %2083 = vmatpush1.bf16.msra.mxu0 0
        %2084 = vmatprep.mubr.bf16.mxu0 0
        %2085 = vmatmul.mubr.bf16.gmra.mrb[0].mxu0 %v2038
        %v2086 = vpop.f32.mrb[0].mxu0
        %v2087 = vadd.f32 0.0, %v2086
        %v2088 = vpop.f32.mrb[0].mxu0
        %v2089 = vpop.f32.mrb[0].mxu0
        %v2090 = vadd.f32 0.0, %v2089
        %v2091 = vpop.f32.mrb[0].mxu0
        %2092 = vmatprep.mubr.bf16.mxu0 0
        %2093 = vmatmul.mubr.bf16.gmra.mrb[0].mxu0 %v2041
        %v2094 = vpop.f32.mrb[0].mxu0
        %v2095 = vadd.f32 0.0, %v2094
        %v2096 = vpop.f32.mrb[0].mxu0
        %v2097 = vpop.f32.mrb[0].mxu0
        %v2098 = vadd.f32 0.0, %v2097
        %v2099 = vpop.f32.mrb[0].mxu0
        %2100 = vmatprep.mubr.bf16.mxu0 0
        %2101 = vmatmul.mubr.bf16.gmra.mrb[0].mxu0 %v2044
        %v2102 = vpop.f32.mrb[0].mxu0
        %v2103 = vadd.f32 0.0, %v2102
        %v2104 = vpop.f32.mrb[0].mxu0
        %v2105 = vpop.f32.mrb[0].mxu0
        %v2106 = vadd.f32 0.0, %v2105
        %v2107 = vpop.f32.mrb[0].mxu0
        %2108 = vmatprep.mubr.bf16.mxu0 0
        %2109 = vmatmul.mubr.bf16.gmra.mrb[0].mxu0 %v2047
        %v2110 = vpop.f32.mrb[0].mxu0
        %v2111 = vadd.f32 0.0, %v2110
        %v2112 = vpop.f32.mrb[0].mxu0
        %v2113 = vpop.f32.mrb[0].mxu0
        %v2114 = vadd.f32 0.0, %v2113
        %v2115 = vpop.f32.mrb[0].mxu0
        %2116 = vdwg.mxu0
        %v2117 = vld [vmem:[#allocation2] sm:$0xff]
        %v2118 = vld [vmem:[#allocation2 + $0x8] sm:$0xff]
        %v2119 = vld [vmem:[#allocation2 + $0x10] sm:$0xff]
        %v2120 = vld [vmem:[#allocation2 + $0x18] sm:$0xff]
        %v2121 = vld [vmem:[#allocation2 + $0x20] sm:$0xff]
        %v2122 = vld [vmem:[#allocation2 + $0x28] sm:$0xff]
        %v2123 = vld [vmem:[#allocation2 + $0x30] sm:$0xff]
        %v2124 = vld [vmem:[#allocation2 + $0x38] sm:$0xff]
        %v2125 = vadd.f32 %v2117, %v2087
        %v2126 = vadd.f32 %v2118, %v2090
        %v2127 = vadd.f32 %v2119, %v2095
        %v2128 = vadd.f32 %v2120, %v2098
        %v2129 = vadd.f32 %v2121, %v2103
        %v2130 = vadd.f32 %v2122, %v2106
        %v2131 = vadd.f32 %v2123, %v2111
        %v2132 = vadd.f32 %v2124, %v2114
        %2133 = vst [vmem:[#allocation2] sm:$0xff] %v2125
        %2134 = vst [vmem:[#allocation2 + $0x8] sm:$0xff] %v2126
        %2135 = vst [vmem:[#allocation2 + $0x10] sm:$0xff] %v2127
        %2136 = vst [vmem:[#allocation2 + $0x18] sm:$0xff] %v2128
        %2137 = vst [vmem:[#allocation2 + $0x20] sm:$0xff] %v2129
        %2138 = vst [vmem:[#allocation2 + $0x28] sm:$0xff] %v2130
        %2139 = vst [vmem:[#allocation2 + $0x30] sm:$0xff] %v2131
        %2140 = vst [vmem:[#allocation2 + $0x38] sm:$0xff] %v2132
        %v2141 = vld [vmem:[%s1780] sm:$0xe]
        %v2142 = vld [vmem:[%s1780 + $0x4] sm:$0xf]
        %v2143 = vld [vmem:[%s1780 + $0x8] sm:$0x1]
        %v2144 = vld [vmem:[%s1780 + $0xc] sm:$0xe]
        %v2145 = vld [vmem:[%s1780 + $0x10] sm:$0xf]
        %v2146 = vld [vmem:[%s1780 + $0x14] sm:$0x1]
        %v2147 = vld [vmem:[%s1780 + $0x18] sm:$0xe]
        %v2148 = vld [vmem:[%s1780 + $0x1c] sm:$0xf]
        %v2149 = vld [vmem:[%s1780 + $0x20] sm:$0x1]
        %v2150 = vld [vmem:[%s1780 + $0x24] sm:$0xe]
        %v2151 = vld [vmem:[%s1780 + $0x28] sm:$0xf]
        %v2152 = vld [vmem:[%s1780 + $0x2c] sm:$0x1]
        %v2165 = vrot.slane %v2141, 5
        %v2166 = vrot.slane %v2165, 4
        %v2167 = vrot.slane %v2142, 5
        %v2168 = vsel %vm1096, %v2166, %v2167
        %v2169 = vrot.slane %v2167, 4
        %v2170 = vrot.slane %v2143, 5
        %v2171 = vsel %vm1096, %v2169, %v2170
        %v2172 = vrot.slane %v2144, 5
        %v2173 = vrot.slane %v2172, 4
        %v2174 = vrot.slane %v2145, 5
        %v2175 = vsel %vm1096, %v2173, %v2174
        %v2176 = vrot.slane %v2174, 4
        %v2177 = vrot.slane %v2146, 5
        %v2178 = vsel %vm1096, %v2176, %v2177
        %v2179 = vrot.slane %v2147, 5
        %v2180 = vrot.slane %v2179, 4
        %v2181 = vrot.slane %v2148, 5
        %v2182 = vsel %vm1096, %v2180, %v2181
        %v2183 = vrot.slane %v2181, 4
        %v2184 = vrot.slane %v2149, 5
        %v2185 = vsel %vm1096, %v2183, %v2184
        %v2186 = vrot.slane %v2150, 5
        %v2187 = vrot.slane %v2186, 4
        %v2188 = vrot.slane %v2151, 5
        %v2189 = vsel %vm1096, %v2187, %v2188
        %v2190 = vrot.slane %v2188, 4
        %v2191 = vrot.slane %v2152, 5
        %v2192 = vsel %vm1096, %v2190, %v2191
        %s2193 = scalar_lea.vmem %s1, 16
        %v2194 = vld [vmem:[%s2193] sm:$0x3]
        %v2195 = vunpack.c.l.b16 %v2168
        %v2196 = vunpack.c.l.b16 %v2171
        %v2197 = vunpack.c.l.b16 %v2175
        %v2198 = vunpack.c.l.b16 %v2178
        %v2199 = vunpack.c.l.b16 %v2182
        %v2200 = vunpack.c.l.b16 %v2185
        %v2201 = vunpack.c.l.b16 %v2189
        %v2202 = vunpack.c.l.b16 %v2192
        %v2203 = vpack.c.b16 %v2196, %v2195
        %v2204 = vpack.c.b16 %v2198, %v2197
        %v2205 = vpack.c.b16 %v2200, %v2199
        %v2206 = vpack.c.b16 %v2202, %v2201
        %v2208 = vsel %vm751, %v2203, 0
        %v2211 = vsel %vm751, %v2204, 0
        %v2214 = vsel %vm751, %v2205, 0
        %v2217 = vsel %vm751, %v2206, 0
        %v2220 = vsel %vm764, %v2194, 0
        %2222 = vmatprep.subr.bf16.mxu0 0
        %2223 = vmatpush1.bf16.msra.mxu0 %v2220
        %2224 = vmatprep.subr.bf16.mxu0 0
        %2225 = vmatpush1.bf16.msra.mxu0 0
        %2226 = vmatprep.subr.bf16.mxu0 0
        %2227 = vmatpush1.bf16.msra.mxu0 0
        %2228 = vmatprep.subr.bf16.mxu0 0
        %2229 = vmatpush1.bf16.msra.mxu0 0
        %2230 = vmatprep.subr.bf16.mxu0 0
        %2231 = vmatpush1.bf16.msra.mxu0 0
        %2232 = vmatprep.subr.bf16.mxu0 0
        %2233 = vmatpush1.bf16.msra.mxu0 0
        %2234 = vmatprep.subr.bf16.mxu0 0
        %2235 = vmatpush1.bf16.msra.mxu0 0
        %2236 = vmatprep.subr.bf16.mxu0 0
        %2237 = vmatpush1.bf16.msra.mxu0 0
        %2238 = vmatprep.subr.bf16.mxu0 0
        %2239 = vmatpush1.bf16.msra.mxu0 0
        %2240 = vmatprep.subr.bf16.mxu0 0
        %2241 = vmatpush1.bf16.msra.mxu0 0
        %2242 = vmatprep.subr.bf16.mxu0 0
        %2243 = vmatpush1.bf16.msra.mxu0 0
        %2244 = vmatprep.subr.bf16.mxu0 0
        %2245 = vmatpush1.bf16.msra.mxu0 0
        %2246 = vmatprep.subr.bf16.mxu0 0
        %2247 = vmatpush1.bf16.msra.mxu0 0
        %2248 = vmatprep.subr.bf16.mxu0 0
        %2249 = vmatpush1.bf16.msra.mxu0 0
        %2250 = vmatprep.subr.bf16.mxu0 0
        %2251 = vmatpush1.bf16.msra.mxu0 0
        %2252 = vmatprep.subr.bf16.mxu0 0
        %2253 = vmatpush1.bf16.msra.mxu0 0
        %2254 = vmatprep.mubr.bf16.mxu0 0
        %2255 = vmatmul.mubr.bf16.gmra.mrb[0].mxu0 %v2208
        %v2256 = vpop.f32.mrb[0].mxu0
        %v2257 = vadd.f32 0.0, %v2256
        %v2258 = vpop.f32.mrb[0].mxu0
        %v2259 = vpop.f32.mrb[0].mxu0
        %v2260 = vadd.f32 0.0, %v2259
        %v2261 = vpop.f32.mrb[0].mxu0
        %2262 = vmatprep.mubr.bf16.mxu0 0
        %2263 = vmatmul.mubr.bf16.gmra.mrb[0].mxu0 %v2211
        %v2264 = vpop.f32.mrb[0].mxu0
        %v2265 = vadd.f32 0.0, %v2264
        %v2266 = vpop.f32.mrb[0].mxu0
        %v2267 = vpop.f32.mrb[0].mxu0
        %v2268 = vadd.f32 0.0, %v2267
        %v2269 = vpop.f32.mrb[0].mxu0
        %2270 = vmatprep.mubr.bf16.mxu0 0
        %2271 = vmatmul.mubr.bf16.gmra.mrb[0].mxu0 %v2214
        %v2272 = vpop.f32.mrb[0].mxu0
        %v2273 = vadd.f32 0.0, %v2272
        %v2274 = vpop.f32.mrb[0].mxu0
        %v2275 = vpop.f32.mrb[0].mxu0
        %v2276 = vadd.f32 0.0, %v2275
        %v2277 = vpop.f32.mrb[0].mxu0
        %2278 = vmatprep.mubr.bf16.mxu0 0
        %2279 = vmatmul.mubr.bf16.gmra.mrb[0].mxu0 %v2217
        %v2280 = vpop.f32.mrb[0].mxu0
        %v2281 = vadd.f32 0.0, %v2280
        %v2282 = vpop.f32.mrb[0].mxu0
        %v2283 = vpop.f32.mrb[0].mxu0
        %v2284 = vadd.f32 0.0, %v2283
        %v2285 = vpop.f32.mrb[0].mxu0
        %2286 = vdwg.mxu0
        %v2287 = vld [vmem:[#allocation2] sm:$0xff]
        %v2288 = vld [vmem:[#allocation2 + $0x8] sm:$0xff]
        %v2289 = vld [vmem:[#allocation2 + $0x10] sm:$0xff]
        %v2290 = vld [vmem:[#allocation2 + $0x18] sm:$0xff]
        %v2291 = vld [vmem:[#allocation2 + $0x20] sm:$0xff]
        %v2292 = vld [vmem:[#allocation2 + $0x28] sm:$0xff]
        %v2293 = vld [vmem:[#allocation2 + $0x30] sm:$0xff]
        %v2294 = vld [vmem:[#allocation2 + $0x38] sm:$0xff]
        %v2295 = vadd.f32 %v2287, %v2257
        %v2296 = vadd.f32 %v2288, %v2260
        %v2297 = vadd.f32 %v2289, %v2265
        %v2298 = vadd.f32 %v2290, %v2268
        %v2299 = vadd.f32 %v2291, %v2273
        %v2300 = vadd.f32 %v2292, %v2276
        %v2301 = vadd.f32 %v2293, %v2281
        %v2302 = vadd.f32 %v2294, %v2284
        %2303 = vst [vmem:[#allocation2] sm:$0xff] %v2295
        %2304 = vst [vmem:[#allocation2 + $0x8] sm:$0xff] %v2296
        %2305 = vst [vmem:[#allocation2 + $0x10] sm:$0xff] %v2297
        %2306 = vst [vmem:[#allocation2 + $0x18] sm:$0xff] %v2298
        %2307 = vst [vmem:[#allocation2 + $0x20] sm:$0xff] %v2299
        %2308 = vst [vmem:[#allocation2 + $0x28] sm:$0xff] %v2300
        %2309 = vst [vmem:[#allocation2 + $0x30] sm:$0xff] %v2301
        %2310 = vst [vmem:[#allocation2 + $0x38] sm:$0xff] %v2302
        %v2311 = vld [vmem:[#allocation2] sm:$0xff]
        %v2312 = vld [vmem:[#allocation2 + $0x8] sm:$0xff]
        %v2313 = vld [vmem:[#allocation2 + $0x10] sm:$0xff]
        %v2314 = vld [vmem:[#allocation2 + $0x18] sm:$0xff]
        %v2315 = vld [vmem:[#allocation2 + $0x20] sm:$0xff]
        %v2316 = vld [vmem:[#allocation2 + $0x28] sm:$0xff]
        %v2317 = vld [vmem:[#allocation2 + $0x30] sm:$0xff]
        %v2318 = vld [vmem:[#allocation2 + $0x38] sm:$0xff]
        %v2319 = vld [vmem:[%s2] sm:$0x1]
        %v2321 = vlaneseq
        %v2322 = vshrl.u32 %v2321, 7
        %v2323 = vsub.s32 0, %v2322
        %v2324 = vrot.slane %v2319, %v2323
        %v2326 = vadd.f32 %v2311, %v2324
        %v2327 = vadd.f32 %v2312, %v2324
        %v2328 = vadd.f32 %v2313, %v2324
        %v2329 = vadd.f32 %v2314, %v2324
        %v2330 = vadd.f32 %v2315, %v2324
        %v2331 = vadd.f32 %v2316, %v2324
        %v2332 = vadd.f32 %v2317, %v2324
        %v2333 = vadd.f32 %v2318, %v2324
        %v2334 = vmax.f32 %v2326, 0.0
        %v2335 = vmax.f32 %v2327, 0.0
        %v2336 = vmax.f32 %v2328, 0.0
        %v2337 = vmax.f32 %v2329, 0.0
        %v2338 = vmax.f32 %v2330, 0.0
        %v2339 = vmax.f32 %v2331, 0.0
        %v2340 = vmax.f32 %v2332, 0.0
        %v2341 = vmax.f32 %v2333, 0.0
        %v2342 = vpack.c.bf16 %v2335, %v2334
        %v2343 = vpack.c.bf16 %v2337, %v2336
        %v2344 = vpack.c.bf16 %v2339, %v2338
        %v2345 = vpack.c.bf16 %v2341, %v2340
        %v2350 = vunpack.c.l.b16 %v2342
        %v2351 = vunpack.c.h.b16 %v2342
        %v2352 = vunpack.c.l.b16 %v2343
        %v2353 = vunpack.c.h.b16 %v2343
        %v2354 = vunpack.c.l.b16 %v2344
        %v2355 = vunpack.c.h.b16 %v2344
        %v2356 = vunpack.c.l.b16 %v2345
        %v2357 = vunpack.c.h.b16 %v2345
        %v2358 = vpack.c.b16 %v2350, %v2350
        %v2359 = vpack.c.b16 %v2351, %v2351
        %v2360 = vpack.c.b16 %v2352, %v2352
        %v2361 = vpack.c.b16 %v2353, %v2353
        %v2362 = vpack.c.b16 %v2354, %v2354
        %v2363 = vpack.c.b16 %v2355, %v2355
        %v2364 = vpack.c.b16 %v2356, %v2356
        %v2365 = vpack.c.b16 %v2357, %v2357
        %2374 = vst [vmem:[%s177] sm:$0xf] %v2358
        %2375 = vst [vmem:[%s177 + $0x4] sm:$0xf] %v2359
        %2376 = vst [vmem:[%s177 + $0x8] sm:$0xf] %v2360
        %2377 = vst [vmem:[%s177 + $0xc] sm:$0xf] %v2361
        %2378 = vst [vmem:[%s177 + $0x10] sm:$0xf] %v2362
        %2379 = vst [vmem:[%s177 + $0x14] sm:$0xf] %v2363
        %2380 = vst [vmem:[%s177 + $0x18] sm:$0xf] %v2364
        %2381 = vst [vmem:[%s177 + $0x1c] sm:$0xf] %v2365
        %s2382 = sand.u32 %s107, 1
        %s2383 = scalar_lea.sflag [#allocation5], %s2382
        %s2384 = sand.u32 %s107, 1
        %s2385 = smul.addr %s2384, 32
        %s2386 = scalar_lea.vmem [#allocation4], %s2385
        // Predicated region
        $region37: #{tpu_custom_call.1} parent=31 // pred_check
          %p2387 = pneg %p117
        $region38: #{tpu_custom_call.1} parent=31 // pred_check_branch
          %2389 = sbr.rel (%p2387) target = $region40
        $region39: #{tpu_custom_call.1} parent=31 // pred_region
          %s2390 = smul.u32 8, %s22
          %s2392 = ssub.s32 512, 512
          %2393 = vsyncadd %s2383, %s2392
          %s2394 = smul.addr %s21, 32
          %s2395 = sadd.s32 %s2390, %s2394
          %s2396 = smul.addr %s2395, 64
          %s2397 = scalar_lea.hbm %s3, %s2396
          %s2398 = sshll.u32 %s2386, 4
          %s2399 = int_to_ptr.vmem [resolvable:$true] %s2398
          %2404 = dma.vmem_to_hbm [thread:$0]  %s2399, 512, %s2397, %s2383, 64, 64, 4
        $region40: #{tpu_custom_call.1} parent=31 // pred_fallthru
          _
      $region32: #{tpu_custom_call.1} parent=5 // pred_fallthru
        _
      %p2405 = scmp.le.s32.totalorder 2, %s12
      // Predicated region
      $region41: #{tpu_custom_call.1} parent=5 // pred_check
        %p2406 = pneg %p2405
      $region42: #{tpu_custom_call.1} parent=5 // pred_check_branch
        %2408 = sbr.rel (%p2406) target = $region44
      $region43: #{tpu_custom_call.1} parent=5 // pred_region
        %s2409 = ssub.s32 %s12, 2
        // Predicated region
        $region45: #{tpu_custom_call.1} parent=43 // pred_check
          %p2410 = pneg %p123
        $region46: #{tpu_custom_call.1} parent=43 // pred_check_branch
          %2412 = sbr.rel (%p2410) target = $region48
        $region47: #{tpu_custom_call.1} parent=43 // pred_region
          %s2413 = sand.u32 %s108, 1
          %s2414 = scalar_lea.sflag [#allocation5], %s2413
          %s2415 = sand.u32 %s108, 1
          %s2416 = smul.addr %s2415, 32
          %s2417 = scalar_lea.vmem [#allocation4], %s2416
          %2418 = dma.done %s2414, 512
        $region48: #{tpu_custom_call.1} parent=43 // pred_fallthru
          _
      $region44: #{tpu_custom_call.1} parent=5 // pred_fallthru
        _
    $region6: #{tpu_custom_call.1} parent=1 // loop_footer
      %s16 = sadd.s32 1, %s12
    $region7: #{tpu_custom_call.1} parent=1 // loop_footer_branch
      %11 = sbr.rel target = $region3
    $region8: #{tpu_custom_call.1} parent=1 // loop_exit
      _
    %2419 = vsyncpa [#allocation5], 1
    %s2420 = scalar_lea.sflag [#allocation5], 1
    %2421 = vsyncpa %s2420, 1

</llo_original>
